<compile_context>
chip_gen: v7x
topology: tpu7x:2x2x1
jax: 0.10.0
libtpu: 0.0.40
codegen_flags: <defaults>
</compile_context>

<pallas_src>
import jax
import jax.numpy as jnp
from jax.experimental import pallas as pl
from jax.experimental.pallas import tpu as pltpu

STATE_DIM = 15
ACTION_DIM = 3
HIDDEN1 = 700
HIDDEN2 = 500
MAX_ACTION = 6.0

# Padded (lane/sublane aligned) dims.  Zero-padding keeps semantics exact.
K1_PAD = 16           # 15  -> 16  (bf16 sublane packing of x / W1 rows)
H1_PAD = 768          # 700 -> 768
H2_PAD = 512          # 500 -> 512
ACTION_PAD = 128      # 3   -> 128 (sliced back to 3 in the wrapper)


def _round_up(x, m):
    return (x + m - 1) // m * m


def actor_kernel(x_ref, w1_ref, b1_ref, w2_ref, b2_ref, w3_ref, b3_ref, o_ref):
    # Layer 1: (bt, 16) bf16 @ (16, 768) bf16 -> f32 accumulate, ReLU in f32.
    h1 = jnp.dot(x_ref[...], w1_ref[...],
                 preferred_element_type=jnp.float32) + b1_ref[...]
    h1 = jnp.maximum(h1, 0.0)

    # Layer 2: (bt, 768) @ (768, 512)
    h2 = jnp.dot(h1.astype(jnp.bfloat16), w2_ref[...],
                 preferred_element_type=jnp.float32) + b2_ref[...]
    h2 = jnp.maximum(h2, 0.0)

    # Layer 3 + tanh epilogue (f32, EUP).
    y = jnp.dot(h2.astype(jnp.bfloat16), w3_ref[...],
                preferred_element_type=jnp.float32) + b3_ref[...]
    o_ref[...] = MAX_ACTION * jnp.tanh(y)


def actor_forward(x, params, *, block_b=1024):
    """x: (B, STATE_DIM) f32.  Returns (B, ACTION_DIM) f32."""
    w1, b1, w2, b2, w3, b3 = params
    B = x.shape[0]

    if B <= block_b:
        # Single grid step: no per-step overhead, weights fetched once.
        bt = _round_up(max(B, 16), 16)
    else:
        # Multi-step: fat, fully packed 128-row tiles.
        bt = _round_up(block_b, 128)
    B_pad = _round_up(B, bt)

    # Pad batch and state dims, cast to bf16 (halves x DMA, packed operand).
    x = jnp.pad(x, ((0, B_pad - B), (0, K1_PAD - STATE_DIM))).astype(jnp.bfloat16)

    grid = (B_pad // bt,)

    # Advisory cost estimate so XLA overlaps this tiny call with neighbors.
    flops = 2 * B_pad * (K1_PAD * H1_PAD + H1_PAD * H2_PAD + H2_PAD * ACTION_PAD)
    bytes_accessed = (
        B_pad * K1_PAD * 2                                     # x (bf16)
        + (K1_PAD * H1_PAD + H1_PAD * H2_PAD + H2_PAD * ACTION_PAD) * 2  # weights bf16
        + (H1_PAD + H2_PAD + ACTION_PAD) * 4                   # biases f32
        + B_pad * ACTION_PAD * 4                               # output f32
    )
    cost = pl.CostEstimate(flops=flops,
                           transcendentals=B_pad * ACTION_PAD,
                           bytes_accessed=bytes_accessed)

    # Weights/biases: constant index_map -> VMEM-resident; single-buffered.
    def resident(shape):
        return pl.BlockSpec(shape, lambda i: (0, 0), pipeline_mode=pl.Buffered(1))

    out = pl.pallas_call(
        actor_kernel,
        out_shape=jax.ShapeDtypeStruct((B_pad, ACTION_PAD), jnp.float32),
        grid_spec=pltpu.PrefetchScalarGridSpec(
            num_scalar_prefetch=0,
            grid=grid,
            in_specs=[
                pl.BlockSpec((bt, K1_PAD), lambda i: (i, 0)),   # x tile (bf16)
                resident((K1_PAD, H1_PAD)),                     # W1
                resident((1, H1_PAD)),                          # b1
                resident((H1_PAD, H2_PAD)),                     # W2
                resident((1, H2_PAD)),                          # b2
                resident((H2_PAD, ACTION_PAD)),                 # W3
                resident((1, ACTION_PAD)),                      # b3
            ],
            out_specs=pl.BlockSpec((bt, ACTION_PAD), lambda i: (i, 0)),
        ),
        compiler_params=pltpu.CompilerParams(
            dimension_semantics=("parallel",),   # shards batch tiles over v7x's 2 TCs
        ),
        cost_estimate=cost,
    )(x, w1, b1, w2, b2, w3, b3)

    return out[:B, :ACTION_DIM]


def init_params(key):
    """nn.Linear default init U(-1/sqrt(fan_in), 1/sqrt(fan_in)), then zero-pad
    to aligned shapes.  Weights stored in bf16, biases in f32."""
    keys = jax.random.split(key, 6)

    def linear(kw, kb, fan_in, fan_out, in_pad, out_pad):
        bound = 1.0 / jnp.sqrt(jnp.float32(fan_in))
        w = jax.random.uniform(kw, (fan_in, fan_out), jnp.float32, -bound, bound)
        b = jax.random.uniform(kb, (1, fan_out), jnp.float32, -bound, bound)
        w = jnp.pad(w, ((0, in_pad - fan_in), (0, out_pad - fan_out)))
        b = jnp.pad(b, ((0, 0), (0, out_pad - fan_out)))
        return w.astype(jnp.bfloat16), b

    w1, b1 = linear(keys[0], keys[1], STATE_DIM, HIDDEN1, K1_PAD, H1_PAD)
    w2, b2 = linear(keys[2], keys[3], HIDDEN1, HIDDEN2, H1_PAD, H2_PAD)
    w3, b3 = linear(keys[4], keys[5], HIDDEN2, ACTION_DIM, H2_PAD, ACTION_PAD)
    return (w1, b1, w2, b2, w3, b3)


def ref_forward(x, params):
    """Plain-JAX reference with identical bf16-matmul / f32-accumulate math."""
    w1, b1, w2, b2, w3, b3 = params
    x = jnp.pad(x, ((0, 0), (0, K1_PAD - STATE_DIM))).astype(jnp.bfloat16)
    h1 = jnp.maximum(
        jnp.dot(x, w1, preferred_element_type=jnp.float32) + b1, 0.0)
    h2 = jnp.maximum(
        jnp.dot(h1.astype(jnp.bfloat16), w2, preferred_element_type=jnp.float32) + b2, 0.0)
    y = jnp.dot(h2.astype(jnp.bfloat16), w3, preferred_element_type=jnp.float32) + b3
    return (MAX_ACTION * jnp.tanh(y))[:, :ACTION_DIM]


if __name__ == "__main__":
    key = jax.random.PRNGKey(0)
    k_params, k_x1, k_x2 = jax.random.split(key, 3)

    params = init_params(k_params)

    # Case 1: small batch (single grid step, bt rounded up to 16).
    x_small = jax.random.normal(k_x1, (8, STATE_DIM), jnp.float32)
    out_small = jax.block_until_ready(actor_forward(x_small, params))
    ref_small = ref_forward(x_small, params)
    assert out_small.shape == (8, ACTION_DIM)
    assert jnp.allclose(out_small, ref_small, atol=1e-2, rtol=1e-2)
    assert bool(jnp.all(jnp.abs(out_small) <= MAX_ACTION + 1e-3))

    # Case 2: large batch (2 grid steps of 1024; weights stay VMEM-resident).
    x_big = jax.random.normal(k_x2, (2048, STATE_DIM), jnp.float32)
    out_big = jax.block_until_ready(actor_forward(x_big, params))
    ref_big = ref_forward(x_big, params)
    assert out_big.shape == (2048, ACTION_DIM)
    assert jnp.allclose(out_big, ref_big, atol=1e-2, rtol=1e-2)

    print("KERNEL_OK")
</pallas_src>

<mosaic_0001>
module attributes {stable_mosaic.version = 11 : i64} {
  func.func @actor_kernel(%arg0: i32, %arg1: memref<16x16xbf16, #tpu.memory_space<vmem>>, %arg2: memref<16x768xbf16, #tpu.memory_space<vmem>>, %arg3: memref<1x768xf32, #tpu.memory_space<vmem>>, %arg4: memref<768x512xbf16, #tpu.memory_space<vmem>>, %arg5: memref<1x512xf32, #tpu.memory_space<vmem>>, %arg6: memref<512x128xbf16, #tpu.memory_space<vmem>>, %arg7: memref<1x128xf32, #tpu.memory_space<vmem>>, %arg8: memref<16x128xf32, #tpu.memory_space<vmem>>) attributes {dimension_semantics = [#tpu.dimension_semantics<parallel>], iteration_bounds = array<i64: 1>, scalar_prefetch = 0 : i64, scratch_operands = 0 : i64, tpu.core_type = #tpu.core_type<tc>, window_params = [{transform_indices = @transform_0, window_bounds = array<i64: 16, 16>}, {pipeline_mode = #tpu.pipeline_mode<synchronous>, transform_indices = @transform_1, window_bounds = array<i64: 16, 768>}, {pipeline_mode = #tpu.pipeline_mode<synchronous>, transform_indices = @transform_2, window_bounds = array<i64: 1, 768>}, {pipeline_mode = #tpu.pipeline_mode<synchronous>, transform_indices = @transform_3, window_bounds = array<i64: 768, 512>}, {pipeline_mode = #tpu.pipeline_mode<synchronous>, transform_indices = @transform_4, window_bounds = array<i64: 1, 512>}, {pipeline_mode = #tpu.pipeline_mode<synchronous>, transform_indices = @transform_5, window_bounds = array<i64: 512, 128>}, {pipeline_mode = #tpu.pipeline_mode<synchronous>, transform_indices = @transform_6, window_bounds = array<i64: 1, 128>}, {transform_indices = @transform_7, window_bounds = array<i64: 16, 128>}]} {
    %c0 = arith.constant 0 : index
    %c0_0 = arith.constant 0 : index
    %0 = vector.load %arg1[%c0, %c0_0] : memref<16x16xbf16, #tpu.memory_space<vmem>>, vector<16x16xbf16>
    %c0_1 = arith.constant 0 : index
    %c0_2 = arith.constant 0 : index
    %1 = vector.load %arg2[%c0_1, %c0_2] : memref<16x768xbf16, #tpu.memory_space<vmem>>, vector<16x768xbf16>
    %cst = arith.constant dense<0.000000e+00> : vector<16x768xf32>
    %2 = tpu.matmul %0, %1, %cst {dimension_numbers = #tpu.dot_dimension_numbers<[1], [0], [0], [1], [0, 0, 1, 1], [], []>} : vector<16x16xbf16>, vector<16x768xbf16>, vector<16x768xf32> -> vector<16x768xf32>
    %c0_3 = arith.constant 0 : index
    %c0_4 = arith.constant 0 : index
    %3 = vector.load %arg3[%c0_3, %c0_4] : memref<1x768xf32, #tpu.memory_space<vmem>>, vector<1x768xf32>
    %4 = vector.broadcast %3 : vector<1x768xf32> to vector<16x768xf32>
    %5 = arith.addf %2, %4 : vector<16x768xf32>
    %cst_5 = arith.constant 0.000000e+00 : f32
    %6 = vector.broadcast %cst_5 : f32 to vector<16x768xf32>
    %7 = arith.maximumf %5, %6 : vector<16x768xf32>
    %8 = arith.truncf %7 : vector<16x768xf32> to vector<16x768xbf16>
    %c0_6 = arith.constant 0 : index
    %c0_7 = arith.constant 0 : index
    %9 = vector.load %arg4[%c0_6, %c0_7] : memref<768x512xbf16, #tpu.memory_space<vmem>>, vector<768x512xbf16>
    %cst_8 = arith.constant dense<0.000000e+00> : vector<16x512xf32>
    %10 = tpu.matmul %8, %9, %cst_8 {dimension_numbers = #tpu.dot_dimension_numbers<[1], [0], [0], [1], [0, 0, 1, 1], [], []>} : vector<16x768xbf16>, vector<768x512xbf16>, vector<16x512xf32> -> vector<16x512xf32>
    %c0_9 = arith.constant 0 : index
    %c0_10 = arith.constant 0 : index
    %11 = vector.load %arg5[%c0_9, %c0_10] : memref<1x512xf32, #tpu.memory_space<vmem>>, vector<1x512xf32>
    %12 = vector.broadcast %11 : vector<1x512xf32> to vector<16x512xf32>
    %13 = arith.addf %10, %12 : vector<16x512xf32>
    %cst_11 = arith.constant 0.000000e+00 : f32
    %14 = vector.broadcast %cst_11 : f32 to vector<16x512xf32>
    %15 = arith.maximumf %13, %14 : vector<16x512xf32>
    %16 = arith.truncf %15 : vector<16x512xf32> to vector<16x512xbf16>
    %c0_12 = arith.constant 0 : index
    %c0_13 = arith.constant 0 : index
    %17 = vector.load %arg6[%c0_12, %c0_13] : memref<512x128xbf16, #tpu.memory_space<vmem>>, vector<512x128xbf16>
    %cst_14 = arith.constant dense<0.000000e+00> : vector<16x128xf32>
    %18 = tpu.matmul %16, %17, %cst_14 {dimension_numbers = #tpu.dot_dimension_numbers<[1], [0], [0], [1], [0, 0, 1, 1], [], []>} : vector<16x512xbf16>, vector<512x128xbf16>, vector<16x128xf32> -> vector<16x128xf32>
    %c0_15 = arith.constant 0 : index
    %c0_16 = arith.constant 0 : index
    %19 = vector.load %arg7[%c0_15, %c0_16] : memref<1x128xf32, #tpu.memory_space<vmem>>, vector<1x128xf32>
    %20 = vector.broadcast %19 : vector<1x128xf32> to vector<16x128xf32>
    %21 = arith.addf %18, %20 : vector<16x128xf32>
    %22 = math.tanh %21 : vector<16x128xf32>
    %cst_17 = arith.constant 6.000000e+00 : f32
    %23 = vector.broadcast %cst_17 : f32 to vector<16x128xf32>
    %24 = arith.mulf %23, %22 : vector<16x128xf32>
    %c0_18 = arith.constant 0 : index
    %c0_19 = arith.constant 0 : index
    %25 = vector.load %arg8[%c0_18, %c0_19] : memref<16x128xf32, #tpu.memory_space<vmem>>, vector<16x128xf32>
    tpu.vector_store %arg8[%c0_18, %c0_19], %24 {strides = array<i32>} : memref<16x128xf32, #tpu.memory_space<vmem>>, vector<16x128xf32>,
    return
  }
  func.func @transform_0(%arg0: i32) -> (i32, i32) {
    %c0_i32 = arith.constant 0 : i32
    %c0_i32_0 = arith.constant 0 : i32
    return %arg0, %c0_i32 : i32, i32
  }
  func.func @transform_1(%arg0: i32) -> (i32, i32) {
    %c0_i32 = arith.constant 0 : i32
    %c0_i32_0 = arith.constant 0 : i32
    %c0_i32_1 = arith.constant 0 : i32
    return %c0_i32, %c0_i32_0 : i32, i32
  }
  func.func @transform_2(%arg0: i32) -> (i32, i32) {
    %c0_i32 = arith.constant 0 : i32
    %c0_i32_0 = arith.constant 0 : i32
    %c0_i32_1 = arith.constant 0 : i32
    return %c0_i32, %c0_i32_0 : i32, i32
  }
  func.func @transform_3(%arg0: i32) -> (i32, i32) {
    %c0_i32 = arith.constant 0 : i32
    %c0_i32_0 = arith.constant 0 : i32
    %c0_i32_1 = arith.constant 0 : i32
    return %c0_i32, %c0_i32_0 : i32, i32
  }
  func.func @transform_4(%arg0: i32) -> (i32, i32) {
    %c0_i32 = arith.constant 0 : i32
    %c0_i32_0 = arith.constant 0 : i32
    %c0_i32_1 = arith.constant 0 : i32
    return %c0_i32, %c0_i32_0 : i32, i32
  }
  func.func @transform_5(%arg0: i32) -> (i32, i32) {
    %c0_i32 = arith.constant 0 : i32
    %c0_i32_0 = arith.constant 0 : i32
    %c0_i32_1 = arith.constant 0 : i32
    return %c0_i32, %c0_i32_0 : i32, i32
  }
  func.func @transform_6(%arg0: i32) -> (i32, i32) {
    %c0_i32 = arith.constant 0 : i32
    %c0_i32_0 = arith.constant 0 : i32
    %c0_i32_1 = arith.constant 0 : i32
    return %c0_i32, %c0_i32_0 : i32, i32
  }
  func.func @transform_7(%arg0: i32) -> (i32, i32) {
    %c0_i32 = arith.constant 0 : i32
    %c0_i32_0 = arith.constant 0 : i32
    return %arg0, %c0_i32 : i32, i32
  }
}

</mosaic_0001>

<llo_original>
// kernel: tpu_custom_call.1
$region0: #{tpu_custom_call.1}
  #allocation0 [shape = 'u32[]', space=smem, size = 0x4, offset = 0x4, fixed_abs, tag = 'smem constant byte address 0x4 - core index']
  #allocation1 [shape = 'u32[144,128]{1,0:T(1,128)}', space=vmem, size = 0x12000, scoped, tag = 'internal scratch']
  %s0 = inlined_call_operand.hbm [shape: bf16[16,16], index: 0, kind: input, shape index: {}]
  %s1 = inlined_call_operand.hbm [shape: bf16[16,768], index: 1, kind: input, shape index: {}]
  %s2 = inlined_call_operand.vmem [shape: f32[1,768], index: 2, kind: input, shape index: {}]
  %s3 = inlined_call_operand.hbm [shape: bf16[768,512], index: 3, kind: input, shape index: {}]
  %s4 = inlined_call_operand.vmem [shape: f32[1,512], index: 4, kind: input, shape index: {}]
  %s5 = inlined_call_operand.hbm [shape: bf16[512,128], index: 5, kind: input, shape index: {}]
  %s6 = inlined_call_operand.vmem [shape: f32[1,128], index: 6, kind: input, shape index: {}]
  %s7 = inlined_call_operand.hbm [shape: f32[16,128], index: 7, kind: output, shape index: {}]
  %s8 = sld [smem:[#allocation0]]
  $region54: #{tpu_custom_call.1} parent=0
    _
  %s10 = ssub.s32 1, %s8
  %s11 = scalar_select 0, %s10, %s8
  $region1: #{tpu_custom_call.1} parent=0
    #allocation2 [shape = 'u8[4096]{0}', space=vmem, size = 0x1000, scoped, tag = 'input window, operand 0, single buffered']
    #allocation3 [shape = 's32[1]{0}', space=sflag, size = 0x4, scoped, tag = 'scoped memory for tpu_custom_call.1']
    #allocation4 [shape = 's32[1]{0}', space=sflag, size = 0x4, scoped, tag = 'scoped memory for tpu_custom_call.1']
    #allocation5 [shape = 'u8[24576]{0}', space=vmem, size = 0x6000, scoped, tag = 'input window, operand 1, single buffered']
    #allocation6 [shape = 's32[1]{0}', space=sflag, size = 0x4, scoped, tag = 'scoped memory for tpu_custom_call.1']
    #allocation7 [shape = 'u8[786432]{0}', space=vmem, size = 0xc0000, scoped, tag = 'input window, operand 3, single buffered']
    #allocation8 [shape = 'u8[131072]{0}', space=vmem, size = 0x20000, scoped, tag = 'input window, operand 5, single buffered']
    #allocation9 [shape = 's32[1]{0}', space=sflag, size = 0x4, scoped, tag = 'scoped memory for tpu_custom_call.1']
    #allocation10 [shape = 'u8[8192]{0}', space=vmem, size = 0x2000, scoped, tag = 'output window, operand 0, single buffered']
    %12 = vsyncpa [#allocation3], 0
    %13 = vsyncpa [#allocation6], 0
    %14 = vsyncpa [#allocation9], 0
    %15 = vsyncpa [#allocation4], 0
    // Predicated region
    $region2: #{tpu_custom_call.1} parent=1 // pred_check
      _
    $region3: #{tpu_custom_call.1} parent=1 // pred_check_branch
      %17 = sbr.rel (0) target = $region5
    $region4: #{tpu_custom_call.1} parent=1 // pred_region
      %s19 = ssub.s32 128, 128
      %20 = vsyncadd [#allocation3], %s19
      %s21 = sshll.u32 [#allocation2], 4
      %s22 = int_to_ptr.vmem [resolvable:$true] %s21
      %27 = dma.hbm_to_vmem [thread:$0]  %s0, 128, %s22, [#allocation3], 64, 64, 4
    $region5: #{tpu_custom_call.1} parent=1 // pred_fallthru
      _
    // Predicated region
    $region6: #{tpu_custom_call.1} parent=1 // pred_check
      _
    $region7: #{tpu_custom_call.1} parent=1 // pred_check_branch
      %29 = sbr.rel (0) target = $region9
    $region8: #{tpu_custom_call.1} parent=1 // pred_region
      %s31 = ssub.s32 768, 768
      %32 = vsyncadd [#allocation6], %s31
      %s33 = sshll.u32 [#allocation5], 4
      %s34 = int_to_ptr.vmem [resolvable:$true] %s33
      %39 = dma.hbm_to_vmem [thread:$0]  %s1, 768, %s34, [#allocation6], 384, 384, 24
    $region9: #{tpu_custom_call.1} parent=1 // pred_fallthru
      _
    // Predicated region
    $region10: #{tpu_custom_call.1} parent=1 // pred_check
      _
    $region11: #{tpu_custom_call.1} parent=1 // pred_check_branch
      %41 = sbr.rel (0) target = $region13
    $region12: #{tpu_custom_call.1} parent=1 // pred_region
      _
    $region13: #{tpu_custom_call.1} parent=1 // pred_fallthru
      _
    // Predicated region
    $region14: #{tpu_custom_call.1} parent=1 // pred_check
      _
    $region15: #{tpu_custom_call.1} parent=1 // pred_check_branch
      %43 = sbr.rel (0) target = $region17
    $region16: #{tpu_custom_call.1} parent=1 // pred_region
      %s45 = ssub.s32 24576, 24576
      %46 = vsyncadd [#allocation6], %s45
      %s47 = sshll.u32 [#allocation7], 4
      %s48 = int_to_ptr.vmem [resolvable:$true] %s47
      %53 = dma.hbm_to_vmem [thread:$0]  %s3, 24576, %s48, [#allocation6], 256, 256, 16
    $region17: #{tpu_custom_call.1} parent=1 // pred_fallthru
      _
    // Predicated region
    $region18: #{tpu_custom_call.1} parent=1 // pred_check
      _
    $region19: #{tpu_custom_call.1} parent=1 // pred_check_branch
      %55 = sbr.rel (0) target = $region21
    $region20: #{tpu_custom_call.1} parent=1 // pred_region
      _
    $region21: #{tpu_custom_call.1} parent=1 // pred_fallthru
      _
    // Predicated region
    $region22: #{tpu_custom_call.1} parent=1 // pred_check
      _
    $region23: #{tpu_custom_call.1} parent=1 // pred_check_branch
      %57 = sbr.rel (0) target = $region25
    $region24: #{tpu_custom_call.1} parent=1 // pred_region
      %s59 = ssub.s32 4096, 4096
      %60 = vsyncadd [#allocation9], %s59
      %s61 = sshll.u32 [#allocation8], 4
      %s62 = int_to_ptr.vmem [resolvable:$true] %s61
      %67 = dma.hbm_to_vmem [thread:$0]  %s5, 4096, %s62, [#allocation9], 64, 64, 4
    $region25: #{tpu_custom_call.1} parent=1 // pred_fallthru
      _
    // Predicated region
    $region26: #{tpu_custom_call.1} parent=1 // pred_check
      _
    $region27: #{tpu_custom_call.1} parent=1 // pred_check_branch
      %69 = sbr.rel (0) target = $region29
    $region28: #{tpu_custom_call.1} parent=1 // pred_region
      _
    $region29: #{tpu_custom_call.1} parent=1 // pred_fallthru
      _
    // Predicated region
    $region30: #{tpu_custom_call.1} parent=1 // pred_check
      _
    $region31: #{tpu_custom_call.1} parent=1 // pred_check_branch
      %71 = sbr.rel (0) target = $region33
    $region32: #{tpu_custom_call.1} parent=1 // pred_region
      %72 = dma.done [#allocation3], 128
    $region33: #{tpu_custom_call.1} parent=1 // pred_fallthru
      _
    // Predicated region
    $region34: #{tpu_custom_call.1} parent=1 // pred_check
      _
    $region35: #{tpu_custom_call.1} parent=1 // pred_check_branch
      %74 = sbr.rel (0) target = $region37
    $region36: #{tpu_custom_call.1} parent=1 // pred_region
      %75 = dma.done [#allocation6], 768
    $region37: #{tpu_custom_call.1} parent=1 // pred_fallthru
      _
    // Predicated region
    $region38: #{tpu_custom_call.1} parent=1 // pred_check
      _
    $region39: #{tpu_custom_call.1} parent=1 // pred_check_branch
      %77 = sbr.rel (0) target = $region41
    $region40: #{tpu_custom_call.1} parent=1 // pred_region
      %78 = dma.done [#allocation6], 24576
    $region41: #{tpu_custom_call.1} parent=1 // pred_fallthru
      _
    // Predicated region
    $region42: #{tpu_custom_call.1} parent=1 // pred_check
      _
    $region43: #{tpu_custom_call.1} parent=1 // pred_check_branch
      %80 = sbr.rel (0) target = $region45
    $region44: #{tpu_custom_call.1} parent=1 // pred_region
      %81 = dma.done [#allocation9], 4096
    $region45: #{tpu_custom_call.1} parent=1 // pred_fallthru
      _
    %v83 = vld [vmem:[#allocation2] sm:$0xf]
    %v84 = vld [vmem:[#allocation2 + $0x4] sm:$0xf]
    %v85 = vld [vmem:[#allocation5] sm:$0xff]
    %v86 = vld [vmem:[#allocation5 + $0x8] sm:$0xff]
    %v87 = vld [vmem:[#allocation5 + $0x10] sm:$0xff]
    %v88 = vld [vmem:[#allocation5 + $0x18] sm:$0xff]
    %v89 = vld [vmem:[#allocation5 + $0x20] sm:$0xff]
    %v90 = vld [vmem:[#allocation5 + $0x28] sm:$0xff]
    %v91 = vld [vmem:[%s2] sm:$0x3f]
    %v93 = vlaneseq
    %v94 = vshrl.u32 %v93, 7
    %v95 = vsub.s32 0, %v94
    %v96 = vrot.slane %v91, %v95
    %v97 = vlaneseq
    %v98 = vshrl.u32 %v97, 7
    %v99 = vsub.s32 1, %v98
    %v100 = vrot.slane %v91, %v99
    %v101 = vlaneseq
    %v102 = vshrl.u32 %v101, 7
    %v103 = vsub.s32 2, %v102
    %v104 = vrot.slane %v91, %v103
    %v105 = vlaneseq
    %v106 = vshrl.u32 %v105, 7
    %v107 = vsub.s32 3, %v106
    %v108 = vrot.slane %v91, %v107
    %v109 = vlaneseq
    %v110 = vshrl.u32 %v109, 7
    %v111 = vsub.s32 4, %v110
    %v112 = vrot.slane %v91, %v111
    %v113 = vlaneseq
    %v114 = vshrl.u32 %v113, 7
    %v115 = vsub.s32 5, %v114
    %v116 = vrot.slane %v91, %v115
    %v125 = vunpack.c.l.b16 %v83
    %v126 = vunpack.c.l.b16 %v84
    %v127 = vpack.c.b16 %v126, %v125
    %v134 = vunpack.c.l.b16 %v85
    %v135 = vunpack.c.h.b16 %v85
    %v136 = vunpack.c.l.b16 %v86
    %v137 = vunpack.c.h.b16 %v86
    %v138 = vunpack.c.l.b16 %v87
    %v139 = vunpack.c.h.b16 %v87
    %v140 = vunpack.c.l.b16 %v88
    %v141 = vunpack.c.h.b16 %v88
    %v142 = vunpack.c.l.b16 %v89
    %v143 = vunpack.c.h.b16 %v89
    %v144 = vunpack.c.l.b16 %v90
    %v145 = vunpack.c.h.b16 %v90
    %v146 = vpack.c.b16 %v140, %v134
    %v147 = vpack.c.b16 %v141, %v135
    %v148 = vpack.c.b16 %v142, %v136
    %v149 = vpack.c.b16 %v143, %v137
    %v150 = vpack.c.b16 %v144, %v138
    %v151 = vpack.c.b16 %v145, %v139
    %vm158 = vcmask 130048
    %v160 = vsel %vm158, %v127, 0
    %162 = vmatprep.subr.bf16.mxu0 %v147
    %163 = vmatpush1.bf16.msra.mxu0 %v146
    %164 = vmatprep.subr.bf16.mxu0 0
    %165 = vmatpush1.bf16.msra.mxu0 0
    %166 = vmatprep.subr.bf16.mxu0 0
    %167 = vmatpush1.bf16.msra.mxu0 0
    %168 = vmatprep.subr.bf16.mxu0 0
    %169 = vmatpush1.bf16.msra.mxu0 0
    %170 = vmatprep.subr.bf16.mxu0 0
    %171 = vmatpush1.bf16.msra.mxu0 0
    %172 = vmatprep.subr.bf16.mxu0 0
    %173 = vmatpush1.bf16.msra.mxu0 0
    %174 = vmatprep.subr.bf16.mxu0 0
    %175 = vmatpush1.bf16.msra.mxu0 0
    %176 = vmatprep.subr.bf16.mxu0 0
    %177 = vmatpush1.bf16.msra.mxu0 0
    %178 = vmatprep.subr.bf16.mxu0 0
    %179 = vmatpush1.bf16.msra.mxu0 0
    %180 = vmatprep.subr.bf16.mxu0 0
    %181 = vmatpush1.bf16.msra.mxu0 0
    %182 = vmatprep.subr.bf16.mxu0 0
    %183 = vmatpush1.bf16.msra.mxu0 0
    %184 = vmatprep.subr.bf16.mxu0 0
    %185 = vmatpush1.bf16.msra.mxu0 0
    %186 = vmatprep.subr.bf16.mxu0 0
    %187 = vmatpush1.bf16.msra.mxu0 0
    %188 = vmatprep.subr.bf16.mxu0 0
    %189 = vmatpush1.bf16.msra.mxu0 0
    %190 = vmatprep.subr.bf16.mxu0 0
    %191 = vmatpush1.bf16.msra.mxu0 0
    %192 = vmatprep.subr.bf16.mxu0 0
    %193 = vmatpush1.bf16.msra.mxu0 0
    %194 = vmatprep.mubr.bf16.mxu0 0
    %195 = vmatmul.mubr.bf16.gmra.mrb[0].mxu0 %v160
    %v196 = vpop.f32.mrb[0].mxu0
    %v197 = vadd.f32 %v96, %v196
    %v198 = vpop.f32.mrb[0].mxu0
    %v199 = vadd.f32 %v100, %v198
    %v200 = vpop.f32.mrb[0].mxu0
    %v201 = vadd.f32 %v96, %v200
    %v202 = vpop.f32.mrb[0].mxu0
    %v203 = vadd.f32 %v100, %v202
    %204 = vdwg.mxu0
    %205 = vmatprep.subr.bf16.mxu0 %v149
    %206 = vmatpush1.bf16.msra.mxu0 %v148
    %207 = vmatprep.subr.bf16.mxu0 0
    %208 = vmatpush1.bf16.msra.mxu0 0
    %209 = vmatprep.subr.bf16.mxu0 0
    %210 = vmatpush1.bf16.msra.mxu0 0
    %211 = vmatprep.subr.bf16.mxu0 0
    %212 = vmatpush1.bf16.msra.mxu0 0
    %213 = vmatprep.subr.bf16.mxu0 0
    %214 = vmatpush1.bf16.msra.mxu0 0
    %215 = vmatprep.subr.bf16.mxu0 0
    %216 = vmatpush1.bf16.msra.mxu0 0
    %217 = vmatprep.subr.bf16.mxu0 0
    %218 = vmatpush1.bf16.msra.mxu0 0
    %219 = vmatprep.subr.bf16.mxu0 0
    %220 = vmatpush1.bf16.msra.mxu0 0
    %221 = vmatprep.subr.bf16.mxu0 0
    %222 = vmatpush1.bf16.msra.mxu0 0
    %223 = vmatprep.subr.bf16.mxu0 0
    %224 = vmatpush1.bf16.msra.mxu0 0
    %225 = vmatprep.subr.bf16.mxu0 0
    %226 = vmatpush1.bf16.msra.mxu0 0
    %227 = vmatprep.subr.bf16.mxu0 0
    %228 = vmatpush1.bf16.msra.mxu0 0
    %229 = vmatprep.subr.bf16.mxu0 0
    %230 = vmatpush1.bf16.msra.mxu0 0
    %231 = vmatprep.subr.bf16.mxu0 0
    %232 = vmatpush1.bf16.msra.mxu0 0
    %233 = vmatprep.subr.bf16.mxu0 0
    %234 = vmatpush1.bf16.msra.mxu0 0
    %235 = vmatprep.subr.bf16.mxu0 0
    %236 = vmatpush1.bf16.msra.mxu0 0
    %237 = vmatprep.mubr.bf16.mxu0 0
    %238 = vmatmul.mubr.bf16.gmra.mrb[0].mxu0 %v160
    %v239 = vpop.f32.mrb[0].mxu0
    %v240 = vadd.f32 %v104, %v239
    %v241 = vpop.f32.mrb[0].mxu0
    %v242 = vadd.f32 %v108, %v241
    %v243 = vpop.f32.mrb[0].mxu0
    %v244 = vadd.f32 %v104, %v243
    %v245 = vpop.f32.mrb[0].mxu0
    %v246 = vadd.f32 %v108, %v245
    %247 = vdwg.mxu0
    %248 = vmatprep.subr.bf16.mxu0 %v151
    %249 = vmatpush1.bf16.msra.mxu0 %v150
    %250 = vmatprep.subr.bf16.mxu0 0
    %251 = vmatpush1.bf16.msra.mxu0 0
    %252 = vmatprep.subr.bf16.mxu0 0
    %253 = vmatpush1.bf16.msra.mxu0 0
    %254 = vmatprep.subr.bf16.mxu0 0
    %255 = vmatpush1.bf16.msra.mxu0 0
    %256 = vmatprep.subr.bf16.mxu0 0
    %257 = vmatpush1.bf16.msra.mxu0 0
    %258 = vmatprep.subr.bf16.mxu0 0
    %259 = vmatpush1.bf16.msra.mxu0 0
    %260 = vmatprep.subr.bf16.mxu0 0
    %261 = vmatpush1.bf16.msra.mxu0 0
    %262 = vmatprep.subr.bf16.mxu0 0
    %263 = vmatpush1.bf16.msra.mxu0 0
    %264 = vmatprep.subr.bf16.mxu0 0
    %265 = vmatpush1.bf16.msra.mxu0 0
    %266 = vmatprep.subr.bf16.mxu0 0
    %267 = vmatpush1.bf16.msra.mxu0 0
    %268 = vmatprep.subr.bf16.mxu0 0
    %269 = vmatpush1.bf16.msra.mxu0 0
    %270 = vmatprep.subr.bf16.mxu0 0
    %271 = vmatpush1.bf16.msra.mxu0 0
    %272 = vmatprep.subr.bf16.mxu0 0
    %273 = vmatpush1.bf16.msra.mxu0 0
    %274 = vmatprep.subr.bf16.mxu0 0
    %275 = vmatpush1.bf16.msra.mxu0 0
    %276 = vmatprep.subr.bf16.mxu0 0
    %277 = vmatpush1.bf16.msra.mxu0 0
    %278 = vmatprep.subr.bf16.mxu0 0
    %279 = vmatpush1.bf16.msra.mxu0 0
    %280 = vmatprep.mubr.bf16.mxu0 0
    %281 = vmatmul.mubr.bf16.gmra.mrb[0].mxu0 %v160
    %v282 = vpop.f32.mrb[0].mxu0
    %v283 = vadd.f32 %v112, %v282
    %v284 = vpop.f32.mrb[0].mxu0
    %v285 = vadd.f32 %v116, %v284
    %v286 = vpop.f32.mrb[0].mxu0
    %v287 = vadd.f32 %v112, %v286
    %v288 = vpop.f32.mrb[0].mxu0
    %v289 = vadd.f32 %v116, %v288
    %290 = vdwg.mxu0
    %v291 = vmax.f32 %v197, 0.0
    %v292 = vmax.f32 %v199, 0.0
    %v293 = vmax.f32 %v240, 0.0
    %v294 = vmax.f32 %v242, 0.0
    %v295 = vmax.f32 %v283, 0.0
    %v296 = vmax.f32 %v285, 0.0
    %v297 = vmax.f32 %v201, 0.0
    %v298 = vmax.f32 %v203, 0.0
    %v299 = vmax.f32 %v244, 0.0
    %v300 = vmax.f32 %v246, 0.0
    %v301 = vmax.f32 %v287, 0.0
    %v302 = vmax.f32 %v289, 0.0
    %v303 = vpack.c.bf16 %v297, %v291
    %v304 = vpack.c.bf16 %v298, %v292
    %v305 = vpack.c.bf16 %v299, %v293
    %v306 = vpack.c.bf16 %v300, %v294
    %v307 = vpack.c.bf16 %v301, %v295
    %v308 = vpack.c.bf16 %v302, %v296
    %v309 = vld [vmem:[#allocation7] sm:$0xff]
    %v310 = vld [vmem:[#allocation7 + $0x8] sm:$0xff]
    %v311 = vld [vmem:[#allocation7 + $0x10] sm:$0xff]
    %v312 = vld [vmem:[#allocation7 + $0x18] sm:$0xff]
    %v313 = vld [vmem:[#allocation7 + $0x20] sm:$0xff]
    %v314 = vld [vmem:[#allocation7 + $0x28] sm:$0xff]
    %v315 = vld [vmem:[#allocation7 + $0x30] sm:$0xff]
    %v316 = vld [vmem:[#allocation7 + $0x38] sm:$0xff]
    %v317 = vld [vmem:[#allocation7 + $0x40] sm:$0xff]
    %v318 = vld [vmem:[#allocation7 + $0x48] sm:$0xff]
    %v319 = vld [vmem:[#allocation7 + $0x50] sm:$0xff]
    %v320 = vld [vmem:[#allocation7 + $0x58] sm:$0xff]
    %v321 = vld [vmem:[#allocation7 + $0x60] sm:$0xff]
    %v322 = vld [vmem:[#allocation7 + $0x68] sm:$0xff]
    %v323 = vld [vmem:[#allocation7 + $0x70] sm:$0xff]
    %v324 = vld [vmem:[#allocation7 + $0x78] sm:$0xff]
    %v325 = vld [vmem:[#allocation7 + $0x80] sm:$0xff]
    %v326 = vld [vmem:[#allocation7 + $0x88] sm:$0xff]
    %v327 = vld [vmem:[#allocation7 + $0x90] sm:$0xff]
    %v328 = vld [vmem:[#allocation7 + $0x98] sm:$0xff]
    %v329 = vld [vmem:[#allocation7 + $0xa0] sm:$0xff]
    %v330 = vld [vmem:[#allocation7 + $0xa8] sm:$0xff]
    %v331 = vld [vmem:[#allocation7 + $0xb0] sm:$0xff]
    %v332 = vld [vmem:[#allocation7 + $0xb8] sm:$0xff]
    %v333 = vld [vmem:[#allocation7 + $0xc0] sm:$0xff]
    %v334 = vld [vmem:[#allocation7 + $0xc8] sm:$0xff]
    %v335 = vld [vmem:[#allocation7 + $0xd0] sm:$0xff]
    %v336 = vld [vmem:[#allocation7 + $0xd8] sm:$0xff]
    %v337 = vld [vmem:[#allocation7 + $0xe0] sm:$0xff]
    %v338 = vld [vmem:[#allocation7 + $0xe8] sm:$0xff]
    %v339 = vld [vmem:[#allocation7 + $0xf0] sm:$0xff]
    %v340 = vld [vmem:[#allocation7 + $0xf8] sm:$0xff]
    %v341 = vld [vmem:[#allocation7 + $0x100] sm:$0xff]
    %v342 = vld [vmem:[#allocation7 + $0x108] sm:$0xff]
    %v343 = vld [vmem:[#allocation7 + $0x110] sm:$0xff]
    %v344 = vld [vmem:[#allocation7 + $0x118] sm:$0xff]
    %v345 = vld [vmem:[#allocation7 + $0x120] sm:$0xff]
    %v346 = vld [vmem:[#allocation7 + $0x128] sm:$0xff]
    %v347 = vld [vmem:[#allocation7 + $0x130] sm:$0xff]
    %v348 = vld [vmem:[#allocation7 + $0x138] sm:$0xff]
    %v349 = vld [vmem:[#allocation7 + $0x140] sm:$0xff]
    %v350 = vld [vmem:[#allocation7 + $0x148] sm:$0xff]
    %v351 = vld [vmem:[#allocation7 + $0x150] sm:$0xff]
    %v352 = vld [vmem:[#allocation7 + $0x158] sm:$0xff]
    %v353 = vld [vmem:[#allocation7 + $0x160] sm:$0xff]
    %v354 = vld [vmem:[#allocation7 + $0x168] sm:$0xff]
    %v355 = vld [vmem:[#allocation7 + $0x170] sm:$0xff]
    %v356 = vld [vmem:[#allocation7 + $0x178] sm:$0xff]
    %v357 = vld [vmem:[#allocation7 + $0x180] sm:$0xff]
    %v358 = vld [vmem:[#allocation7 + $0x188] sm:$0xff]
    %v359 = vld [vmem:[#allocation7 + $0x190] sm:$0xff]
    %v360 = vld [vmem:[#allocation7 + $0x198] sm:$0xff]
    %v361 = vld [vmem:[#allocation7 + $0x1a0] sm:$0xff]
    %v362 = vld [vmem:[#allocation7 + $0x1a8] sm:$0xff]
    %v363 = vld [vmem:[#allocation7 + $0x1b0] sm:$0xff]
    %v364 = vld [vmem:[#allocation7 + $0x1b8] sm:$0xff]
    %v365 = vld [vmem:[#allocation7 + $0x1c0] sm:$0xff]
    %v366 = vld [vmem:[#allocation7 + $0x1c8] sm:$0xff]
    %v367 = vld [vmem:[#allocation7 + $0x1d0] sm:$0xff]
    %v368 = vld [vmem:[#allocation7 + $0x1d8] sm:$0xff]
    %v369 = vld [vmem:[#allocation7 + $0x1e0] sm:$0xff]
    %v370 = vld [vmem:[#allocation7 + $0x1e8] sm:$0xff]
    %v371 = vld [vmem:[#allocation7 + $0x1f0] sm:$0xff]
    %v372 = vld [vmem:[#allocation7 + $0x1f8] sm:$0xff]
    %v373 = vld [vmem:[#allocation7 + $0x200] sm:$0xff]
    %v374 = vld [vmem:[#allocation7 + $0x208] sm:$0xff]
    %v375 = vld [vmem:[#allocation7 + $0x210] sm:$0xff]
    %v376 = vld [vmem:[#allocation7 + $0x218] sm:$0xff]
    %v377 = vld [vmem:[#allocation7 + $0x220] sm:$0xff]
    %v378 = vld [vmem:[#allocation7 + $0x228] sm:$0xff]
    %v379 = vld [vmem:[#allocation7 + $0x230] sm:$0xff]
    %v380 = vld [vmem:[#allocation7 + $0x238] sm:$0xff]
    %v381 = vld [vmem:[#allocation7 + $0x240] sm:$0xff]
    %v382 = vld [vmem:[#allocation7 + $0x248] sm:$0xff]
    %v383 = vld [vmem:[#allocation7 + $0x250] sm:$0xff]
    %v384 = vld [vmem:[#allocation7 + $0x258] sm:$0xff]
    %v385 = vld [vmem:[#allocation7 + $0x260] sm:$0xff]
    %v386 = vld [vmem:[#allocation7 + $0x268] sm:$0xff]
    %v387 = vld [vmem:[#allocation7 + $0x270] sm:$0xff]
    %v388 = vld [vmem:[#allocation7 + $0x278] sm:$0xff]
    %v389 = vld [vmem:[#allocation7 + $0x280] sm:$0xff]
    %v390 = vld [vmem:[#allocation7 + $0x288] sm:$0xff]
    %v391 = vld [vmem:[#allocation7 + $0x290] sm:$0xff]
    %v392 = vld [vmem:[#allocation7 + $0x298] sm:$0xff]
    %v393 = vld [vmem:[#allocation7 + $0x2a0] sm:$0xff]
    %v394 = vld [vmem:[#allocation7 + $0x2a8] sm:$0xff]
    %v395 = vld [vmem:[#allocation7 + $0x2b0] sm:$0xff]
    %v396 = vld [vmem:[#allocation7 + $0x2b8] sm:$0xff]
    %v397 = vld [vmem:[#allocation7 + $0x2c0] sm:$0xff]
    %v398 = vld [vmem:[#allocation7 + $0x2c8] sm:$0xff]
    %v399 = vld [vmem:[#allocation7 + $0x2d0] sm:$0xff]
    %v400 = vld [vmem:[#allocation7 + $0x2d8] sm:$0xff]
    %v401 = vld [vmem:[#allocation7 + $0x2e0] sm:$0xff]
    %v402 = vld [vmem:[#allocation7 + $0x2e8] sm:$0xff]
    %v403 = vld [vmem:[#allocation7 + $0x2f0] sm:$0xff]
    %v404 = vld [vmem:[#allocation7 + $0x2f8] sm:$0xff]
    %v405 = vld [vmem:[#allocation7 + $0x300] sm:$0xff]
    %v406 = vld [vmem:[#allocation7 + $0x308] sm:$0xff]
    %v407 = vld [vmem:[#allocation7 + $0x310] sm:$0xff]
    %v408 = vld [vmem:[#allocation7 + $0x318] sm:$0xff]
    %v409 = vld [vmem:[#allocation7 + $0x320] sm:$0xff]
    %v410 = vld [vmem:[#allocation7 + $0x328] sm:$0xff]
    %v411 = vld [vmem:[#allocation7 + $0x330] sm:$0xff]
    %v412 = vld [vmem:[#allocation7 + $0x338] sm:$0xff]
    %v413 = vld [vmem:[#allocation7 + $0x340] sm:$0xff]
    %v414 = vld [vmem:[#allocation7 + $0x348] sm:$0xff]
    %v415 = vld [vmem:[#allocation7 + $0x350] sm:$0xff]
    %v416 = vld [vmem:[#allocation7 + $0x358] sm:$0xff]
    %v417 = vld [vmem:[#allocation7 + $0x360] sm:$0xff]
    %v418 = vld [vmem:[#allocation7 + $0x368] sm:$0xff]
    %v419 = vld [vmem:[#allocation7 + $0x370] sm:$0xff]
    %v420 = vld [vmem:[#allocation7 + $0x378] sm:$0xff]
    %v421 = vld [vmem:[#allocation7 + $0x380] sm:$0xff]
    %v422 = vld [vmem:[#allocation7 + $0x388] sm:$0xff]
    %v423 = vld [vmem:[#allocation7 + $0x390] sm:$0xff]
    %v424 = vld [vmem:[#allocation7 + $0x398] sm:$0xff]
    %v425 = vld [vmem:[#allocation7 + $0x3a0] sm:$0xff]
    %v426 = vld [vmem:[#allocation7 + $0x3a8] sm:$0xff]
    %v427 = vld [vmem:[#allocation7 + $0x3b0] sm:$0xff]
    %v428 = vld [vmem:[#allocation7 + $0x3b8] sm:$0xff]
    %v429 = vld [vmem:[#allocation7 + $0x3c0] sm:$0xff]
    %v430 = vld [vmem:[#allocation7 + $0x3c8] sm:$0xff]
    %v431 = vld [vmem:[#allocation7 + $0x3d0] sm:$0xff]
    %v432 = vld [vmem:[#allocation7 + $0x3d8] sm:$0xff]
    %v433 = vld [vmem:[#allocation7 + $0x3e0] sm:$0xff]
    %v434 = vld [vmem:[#allocation7 + $0x3e8] sm:$0xff]
    %v435 = vld [vmem:[#allocation7 + $0x3f0] sm:$0xff]
    %v436 = vld [vmem:[#allocation7 + $0x3f8] sm:$0xff]
    %v437 = vld [vmem:[#allocation7 + $0x400] sm:$0xff]
    %v438 = vld [vmem:[#allocation7 + $0x408] sm:$0xff]
    %v439 = vld [vmem:[#allocation7 + $0x410] sm:$0xff]
    %v440 = vld [vmem:[#allocation7 + $0x418] sm:$0xff]
    %v441 = vld [vmem:[#allocation7 + $0x420] sm:$0xff]
    %v442 = vld [vmem:[#allocation7 + $0x428] sm:$0xff]
    %v443 = vld [vmem:[#allocation7 + $0x430] sm:$0xff]
    %v444 = vld [vmem:[#allocation7 + $0x438] sm:$0xff]
    %v445 = vld [vmem:[#allocation7 + $0x440] sm:$0xff]
    %v446 = vld [vmem:[#allocation7 + $0x448] sm:$0xff]
    %v447 = vld [vmem:[#allocation7 + $0x450] sm:$0xff]
    %v448 = vld [vmem:[#allocation7 + $0x458] sm:$0xff]
    %v449 = vld [vmem:[#allocation7 + $0x460] sm:$0xff]
    %v450 = vld [vmem:[#allocation7 + $0x468] sm:$0xff]
    %v451 = vld [vmem:[#allocation7 + $0x470] sm:$0xff]
    %v452 = vld [vmem:[#allocation7 + $0x478] sm:$0xff]
    %v453 = vld [vmem:[#allocation7 + $0x480] sm:$0xff]
    %v454 = vld [vmem:[#allocation7 + $0x488] sm:$0xff]
    %v455 = vld [vmem:[#allocation7 + $0x490] sm:$0xff]
    %v456 = vld [vmem:[#allocation7 + $0x498] sm:$0xff]
    %v457 = vld [vmem:[#allocation7 + $0x4a0] sm:$0xff]
    %v458 = vld [vmem:[#allocation7 + $0x4a8] sm:$0xff]
    %v459 = vld [vmem:[#allocation7 + $0x4b0] sm:$0xff]
    %v460 = vld [vmem:[#allocation7 + $0x4b8] sm:$0xff]
    %v461 = vld [vmem:[#allocation7 + $0x4c0] sm:$0xff]
    %v462 = vld [vmem:[#allocation7 + $0x4c8] sm:$0xff]
    %v463 = vld [vmem:[#allocation7 + $0x4d0] sm:$0xff]
    %v464 = vld [vmem:[#allocation7 + $0x4d8] sm:$0xff]
    %v465 = vld [vmem:[#allocation7 + $0x4e0] sm:$0xff]
    %v466 = vld [vmem:[#allocation7 + $0x4e8] sm:$0xff]
    %v467 = vld [vmem:[#allocation7 + $0x4f0] sm:$0xff]
    %v468 = vld [vmem:[#allocation7 + $0x4f8] sm:$0xff]
    %v469 = vld [vmem:[#allocation7 + $0x500] sm:$0xff]
    %v470 = vld [vmem:[#allocation7 + $0x508] sm:$0xff]
    %v471 = vld [vmem:[#allocation7 + $0x510] sm:$0xff]
    %v472 = vld [vmem:[#allocation7 + $0x518] sm:$0xff]
    %v473 = vld [vmem:[#allocation7 + $0x520] sm:$0xff]
    %v474 = vld [vmem:[#allocation7 + $0x528] sm:$0xff]
    %v475 = vld [vmem:[#allocation7 + $0x530] sm:$0xff]
    %v476 = vld [vmem:[#allocation7 + $0x538] sm:$0xff]
    %v477 = vld [vmem:[#allocation7 + $0x540] sm:$0xff]
    %v478 = vld [vmem:[#allocation7 + $0x548] sm:$0xff]
    %v479 = vld [vmem:[#allocation7 + $0x550] sm:$0xff]
    %v480 = vld [vmem:[#allocation7 + $0x558] sm:$0xff]
    %v481 = vld [vmem:[#allocation7 + $0x560] sm:$0xff]
    %v482 = vld [vmem:[#allocation7 + $0x568] sm:$0xff]
    %v483 = vld [vmem:[#allocation7 + $0x570] sm:$0xff]
    %v484 = vld [vmem:[#allocation7 + $0x578] sm:$0xff]
    %v485 = vld [vmem:[#allocation7 + $0x580] sm:$0xff]
    %v486 = vld [vmem:[#allocation7 + $0x588] sm:$0xff]
    %v487 = vld [vmem:[#allocation7 + $0x590] sm:$0xff]
    %v488 = vld [vmem:[#allocation7 + $0x598] sm:$0xff]
    %v489 = vld [vmem:[#allocation7 + $0x5a0] sm:$0xff]
    %v490 = vld [vmem:[#allocation7 + $0x5a8] sm:$0xff]
    %v491 = vld [vmem:[#allocation7 + $0x5b0] sm:$0xff]
    %v492 = vld [vmem:[#allocation7 + $0x5b8] sm:$0xff]
    %v493 = vld [vmem:[#allocation7 + $0x5c0] sm:$0xff]
    %v494 = vld [vmem:[#allocation7 + $0x5c8] sm:$0xff]
    %v495 = vld [vmem:[#allocation7 + $0x5d0] sm:$0xff]
    %v496 = vld [vmem:[#allocation7 + $0x5d8] sm:$0xff]
    %v497 = vld [vmem:[#allocation7 + $0x5e0] sm:$0xff]
    %v498 = vld [vmem:[#allocation7 + $0x5e8] sm:$0xff]
    %v499 = vld [vmem:[#allocation7 + $0x5f0] sm:$0xff]
    %v500 = vld [vmem:[#allocation7 + $0x5f8] sm:$0xff]
    %v501 = vld [vmem:[%s4] sm:$0xf]
    %v503 = vlaneseq
    %v504 = vshrl.u32 %v503, 7
    %v505 = vsub.s32 0, %v504
    %v506 = vrot.slane %v501, %v505
    %v507 = vlaneseq
    %v508 = vshrl.u32 %v507, 7
    %v509 = vsub.s32 1, %v508
    %v510 = vrot.slane %v501, %v509
    %v511 = vlaneseq
    %v512 = vshrl.u32 %v511, 7
    %v513 = vsub.s32 2, %v512
    %v514 = vrot.slane %v501, %v513
    %v515 = vlaneseq
    %v516 = vshrl.u32 %v515, 7
    %v517 = vsub.s32 3, %v516
    %v518 = vrot.slane %v501, %v517
    %v715 = vunpack.c.l.b16 %v309
    %v716 = vunpack.c.h.b16 %v309
    %v717 = vunpack.c.l.b16 %v310
    %v718 = vunpack.c.h.b16 %v310
    %v719 = vunpack.c.l.b16 %v311
    %v720 = vunpack.c.h.b16 %v311
    %v721 = vunpack.c.l.b16 %v312
    %v722 = vunpack.c.h.b16 %v312
    %v723 = vunpack.c.l.b16 %v313
    %v724 = vunpack.c.h.b16 %v313
    %v725 = vunpack.c.l.b16 %v314
    %v726 = vunpack.c.h.b16 %v314
    %v727 = vunpack.c.l.b16 %v315
    %v728 = vunpack.c.h.b16 %v315
    %v729 = vunpack.c.l.b16 %v316
    %v730 = vunpack.c.h.b16 %v316
    %v731 = vunpack.c.l.b16 %v317
    %v732 = vunpack.c.h.b16 %v317
    %v733 = vunpack.c.l.b16 %v318
    %v734 = vunpack.c.h.b16 %v318
    %v735 = vunpack.c.l.b16 %v319
    %v736 = vunpack.c.h.b16 %v319
    %v737 = vunpack.c.l.b16 %v320
    %v738 = vunpack.c.h.b16 %v320
    %v739 = vunpack.c.l.b16 %v321
    %v740 = vunpack.c.h.b16 %v321
    %v741 = vunpack.c.l.b16 %v322
    %v742 = vunpack.c.h.b16 %v322
    %v743 = vunpack.c.l.b16 %v323
    %v744 = vunpack.c.h.b16 %v323
    %v745 = vunpack.c.l.b16 %v324
    %v746 = vunpack.c.h.b16 %v324
    %v747 = vunpack.c.l.b16 %v325
    %v748 = vunpack.c.h.b16 %v325
    %v749 = vunpack.c.l.b16 %v326
    %v750 = vunpack.c.h.b16 %v326
    %v751 = vunpack.c.l.b16 %v327
    %v752 = vunpack.c.h.b16 %v327
    %v753 = vunpack.c.l.b16 %v328
    %v754 = vunpack.c.h.b16 %v328
    %v755 = vunpack.c.l.b16 %v329
    %v756 = vunpack.c.h.b16 %v329
    %v757 = vunpack.c.l.b16 %v330
    %v758 = vunpack.c.h.b16 %v330
    %v759 = vunpack.c.l.b16 %v331
    %v760 = vunpack.c.h.b16 %v331
    %v761 = vunpack.c.l.b16 %v332
    %v762 = vunpack.c.h.b16 %v332
    %v763 = vunpack.c.l.b16 %v333
    %v764 = vunpack.c.h.b16 %v333
    %v765 = vunpack.c.l.b16 %v334
    %v766 = vunpack.c.h.b16 %v334
    %v767 = vunpack.c.l.b16 %v335
    %v768 = vunpack.c.h.b16 %v335
    %v769 = vunpack.c.l.b16 %v336
    %v770 = vunpack.c.h.b16 %v336
    %v771 = vunpack.c.l.b16 %v337
    %v772 = vunpack.c.h.b16 %v337
    %v773 = vunpack.c.l.b16 %v338
    %v774 = vunpack.c.h.b16 %v338
    %v775 = vunpack.c.l.b16 %v339
    %v776 = vunpack.c.h.b16 %v339
    %v777 = vunpack.c.l.b16 %v340
    %v778 = vunpack.c.h.b16 %v340
    %v779 = vunpack.c.l.b16 %v341
    %v780 = vunpack.c.h.b16 %v341
    %v781 = vunpack.c.l.b16 %v342
    %v782 = vunpack.c.h.b16 %v342
    %v783 = vunpack.c.l.b16 %v343
    %v784 = vunpack.c.h.b16 %v343
    %v785 = vunpack.c.l.b16 %v344
    %v786 = vunpack.c.h.b16 %v344
    %v787 = vunpack.c.l.b16 %v345
    %v788 = vunpack.c.h.b16 %v345
    %v789 = vunpack.c.l.b16 %v346
    %v790 = vunpack.c.h.b16 %v346
    %v791 = vunpack.c.l.b16 %v347
    %v792 = vunpack.c.h.b16 %v347
    %v793 = vunpack.c.l.b16 %v348
    %v794 = vunpack.c.h.b16 %v348
    %v795 = vunpack.c.l.b16 %v349
    %v796 = vunpack.c.h.b16 %v349
    %v797 = vunpack.c.l.b16 %v350
    %v798 = vunpack.c.h.b16 %v350
    %v799 = vunpack.c.l.b16 %v351
    %v800 = vunpack.c.h.b16 %v351
    %v801 = vunpack.c.l.b16 %v352
    %v802 = vunpack.c.h.b16 %v352
    %v803 = vunpack.c.l.b16 %v353
    %v804 = vunpack.c.h.b16 %v353
    %v805 = vunpack.c.l.b16 %v354
    %v806 = vunpack.c.h.b16 %v354
    %v807 = vunpack.c.l.b16 %v355
    %v808 = vunpack.c.h.b16 %v355
    %v809 = vunpack.c.l.b16 %v356
    %v810 = vunpack.c.h.b16 %v356
    %v811 = vunpack.c.l.b16 %v357
    %v812 = vunpack.c.h.b16 %v357
    %v813 = vunpack.c.l.b16 %v358
    %v814 = vunpack.c.h.b16 %v358
    %v815 = vunpack.c.l.b16 %v359
    %v816 = vunpack.c.h.b16 %v359
    %v817 = vunpack.c.l.b16 %v360
    %v818 = vunpack.c.h.b16 %v360
    %v819 = vunpack.c.l.b16 %v361
    %v820 = vunpack.c.h.b16 %v361
    %v821 = vunpack.c.l.b16 %v362
    %v822 = vunpack.c.h.b16 %v362
    %v823 = vunpack.c.l.b16 %v363
    %v824 = vunpack.c.h.b16 %v363
    %v825 = vunpack.c.l.b16 %v364
    %v826 = vunpack.c.h.b16 %v364
    %v827 = vunpack.c.l.b16 %v365
    %v828 = vunpack.c.h.b16 %v365
    %v829 = vunpack.c.l.b16 %v366
    %v830 = vunpack.c.h.b16 %v366
    %v831 = vunpack.c.l.b16 %v367
    %v832 = vunpack.c.h.b16 %v367
    %v833 = vunpack.c.l.b16 %v368
    %v834 = vunpack.c.h.b16 %v368
    %v835 = vunpack.c.l.b16 %v369
    %v836 = vunpack.c.h.b16 %v369
    %v837 = vunpack.c.l.b16 %v370
    %v838 = vunpack.c.h.b16 %v370
    %v839 = vunpack.c.l.b16 %v371
    %v840 = vunpack.c.h.b16 %v371
    %v841 = vunpack.c.l.b16 %v372
    %v842 = vunpack.c.h.b16 %v372
    %v843 = vunpack.c.l.b16 %v373
    %v844 = vunpack.c.h.b16 %v373
    %v845 = vunpack.c.l.b16 %v374
    %v846 = vunpack.c.h.b16 %v374
    %v847 = vunpack.c.l.b16 %v375
    %v848 = vunpack.c.h.b16 %v375
    %v849 = vunpack.c.l.b16 %v376
    %v850 = vunpack.c.h.b16 %v376
    %v851 = vunpack.c.l.b16 %v377
    %v852 = vunpack.c.h.b16 %v377
    %v853 = vunpack.c.l.b16 %v378
    %v854 = vunpack.c.h.b16 %v378
    %v855 = vunpack.c.l.b16 %v379
    %v856 = vunpack.c.h.b16 %v379
    %v857 = vunpack.c.l.b16 %v380
    %v858 = vunpack.c.h.b16 %v380
    %v859 = vunpack.c.l.b16 %v381
    %v860 = vunpack.c.h.b16 %v381
    %v861 = vunpack.c.l.b16 %v382
    %v862 = vunpack.c.h.b16 %v382
    %v863 = vunpack.c.l.b16 %v383
    %v864 = vunpack.c.h.b16 %v383
    %v865 = vunpack.c.l.b16 %v384
    %v866 = vunpack.c.h.b16 %v384
    %v867 = vunpack.c.l.b16 %v385
    %v868 = vunpack.c.h.b16 %v385
    %v869 = vunpack.c.l.b16 %v386
    %v870 = vunpack.c.h.b16 %v386
    %v871 = vunpack.c.l.b16 %v387
    %v872 = vunpack.c.h.b16 %v387
    %v873 = vunpack.c.l.b16 %v388
    %v874 = vunpack.c.h.b16 %v388
    %v875 = vunpack.c.l.b16 %v389
    %v876 = vunpack.c.h.b16 %v389
    %v877 = vunpack.c.l.b16 %v390
    %v878 = vunpack.c.h.b16 %v390
    %v879 = vunpack.c.l.b16 %v391
    %v880 = vunpack.c.h.b16 %v391
    %v881 = vunpack.c.l.b16 %v392
    %v882 = vunpack.c.h.b16 %v392
    %v883 = vunpack.c.l.b16 %v393
    %v884 = vunpack.c.h.b16 %v393
    %v885 = vunpack.c.l.b16 %v394
    %v886 = vunpack.c.h.b16 %v394
    %v887 = vunpack.c.l.b16 %v395
    %v888 = vunpack.c.h.b16 %v395
    %v889 = vunpack.c.l.b16 %v396
    %v890 = vunpack.c.h.b16 %v396
    %v891 = vunpack.c.l.b16 %v397
    %v892 = vunpack.c.h.b16 %v397
    %v893 = vunpack.c.l.b16 %v398
    %v894 = vunpack.c.h.b16 %v398
    %v895 = vunpack.c.l.b16 %v399
    %v896 = vunpack.c.h.b16 %v399
    %v897 = vunpack.c.l.b16 %v400
    %v898 = vunpack.c.h.b16 %v400
    %v899 = vunpack.c.l.b16 %v401
    %v900 = vunpack.c.h.b16 %v401
    %v901 = vunpack.c.l.b16 %v402
    %v902 = vunpack.c.h.b16 %v402
    %v903 = vunpack.c.l.b16 %v403
    %v904 = vunpack.c.h.b16 %v403
    %v905 = vunpack.c.l.b16 %v404
    %v906 = vunpack.c.h.b16 %v404
    %v907 = vunpack.c.l.b16 %v405
    %v908 = vunpack.c.h.b16 %v405
    %v909 = vunpack.c.l.b16 %v406
    %v910 = vunpack.c.h.b16 %v406
    %v911 = vunpack.c.l.b16 %v407
    %v912 = vunpack.c.h.b16 %v407
    %v913 = vunpack.c.l.b16 %v408
    %v914 = vunpack.c.h.b16 %v408
    %v915 = vunpack.c.l.b16 %v409
    %v916 = vunpack.c.h.b16 %v409
    %v917 = vunpack.c.l.b16 %v410
    %v918 = vunpack.c.h.b16 %v410
    %v919 = vunpack.c.l.b16 %v411
    %v920 = vunpack.c.h.b16 %v411
    %v921 = vunpack.c.l.b16 %v412
    %v922 = vunpack.c.h.b16 %v412
    %v923 = vunpack.c.l.b16 %v413
    %v924 = vunpack.c.h.b16 %v413
    %v925 = vunpack.c.l.b16 %v414
    %v926 = vunpack.c.h.b16 %v414
    %v927 = vunpack.c.l.b16 %v415
    %v928 = vunpack.c.h.b16 %v415
    %v929 = vunpack.c.l.b16 %v416
    %v930 = vunpack.c.h.b16 %v416
    %v931 = vunpack.c.l.b16 %v417
    %v932 = vunpack.c.h.b16 %v417
    %v933 = vunpack.c.l.b16 %v418
    %v934 = vunpack.c.h.b16 %v418
    %v935 = vunpack.c.l.b16 %v419
    %v936 = vunpack.c.h.b16 %v419
    %v937 = vunpack.c.l.b16 %v420
    %v938 = vunpack.c.h.b16 %v420
    %v939 = vunpack.c.l.b16 %v421
    %v940 = vunpack.c.h.b16 %v421
    %v941 = vunpack.c.l.b16 %v422
    %v942 = vunpack.c.h.b16 %v422
    %v943 = vunpack.c.l.b16 %v423
    %v944 = vunpack.c.h.b16 %v423
    %v945 = vunpack.c.l.b16 %v424
    %v946 = vunpack.c.h.b16 %v424
    %v947 = vunpack.c.l.b16 %v425
    %v948 = vunpack.c.h.b16 %v425
    %v949 = vunpack.c.l.b16 %v426
    %v950 = vunpack.c.h.b16 %v426
    %v951 = vunpack.c.l.b16 %v427
    %v952 = vunpack.c.h.b16 %v427
    %v953 = vunpack.c.l.b16 %v428
    %v954 = vunpack.c.h.b16 %v428
    %v955 = vunpack.c.l.b16 %v429
    %v956 = vunpack.c.h.b16 %v429
    %v957 = vunpack.c.l.b16 %v430
    %v958 = vunpack.c.h.b16 %v430
    %v959 = vunpack.c.l.b16 %v431
    %v960 = vunpack.c.h.b16 %v431
    %v961 = vunpack.c.l.b16 %v432
    %v962 = vunpack.c.h.b16 %v432
    %v963 = vunpack.c.l.b16 %v433
    %v964 = vunpack.c.h.b16 %v433
    %v965 = vunpack.c.l.b16 %v434
    %v966 = vunpack.c.h.b16 %v434
    %v967 = vunpack.c.l.b16 %v435
    %v968 = vunpack.c.h.b16 %v435
    %v969 = vunpack.c.l.b16 %v436
    %v970 = vunpack.c.h.b16 %v436
    %v971 = vunpack.c.l.b16 %v437
    %v972 = vunpack.c.h.b16 %v437
    %v973 = vunpack.c.l.b16 %v438
    %v974 = vunpack.c.h.b16 %v438
    %v975 = vunpack.c.l.b16 %v439
    %v976 = vunpack.c.h.b16 %v439
    %v977 = vunpack.c.l.b16 %v440
    %v978 = vunpack.c.h.b16 %v440
    %v979 = vunpack.c.l.b16 %v441
    %v980 = vunpack.c.h.b16 %v441
    %v981 = vunpack.c.l.b16 %v442
    %v982 = vunpack.c.h.b16 %v442
    %v983 = vunpack.c.l.b16 %v443
    %v984 = vunpack.c.h.b16 %v443
    %v985 = vunpack.c.l.b16 %v444
    %v986 = vunpack.c.h.b16 %v444
    %v987 = vunpack.c.l.b16 %v445
    %v988 = vunpack.c.h.b16 %v445
    %v989 = vunpack.c.l.b16 %v446
    %v990 = vunpack.c.h.b16 %v446
    %v991 = vunpack.c.l.b16 %v447
    %v992 = vunpack.c.h.b16 %v447
    %v993 = vunpack.c.l.b16 %v448
    %v994 = vunpack.c.h.b16 %v448
    %v995 = vunpack.c.l.b16 %v449
    %v996 = vunpack.c.h.b16 %v449
    %v997 = vunpack.c.l.b16 %v450
    %v998 = vunpack.c.h.b16 %v450
    %v999 = vunpack.c.l.b16 %v451
    %v1000 = vunpack.c.h.b16 %v451
    %v1001 = vunpack.c.l.b16 %v452
    %v1002 = vunpack.c.h.b16 %v452
    %v1003 = vunpack.c.l.b16 %v453
    %v1004 = vunpack.c.h.b16 %v453
    %v1005 = vunpack.c.l.b16 %v454
    %v1006 = vunpack.c.h.b16 %v454
    %v1007 = vunpack.c.l.b16 %v455
    %v1008 = vunpack.c.h.b16 %v455
    %v1009 = vunpack.c.l.b16 %v456
    %v1010 = vunpack.c.h.b16 %v456
    %v1011 = vunpack.c.l.b16 %v457
    %v1012 = vunpack.c.h.b16 %v457
    %v1013 = vunpack.c.l.b16 %v458
    %v1014 = vunpack.c.h.b16 %v458
    %v1015 = vunpack.c.l.b16 %v459
    %v1016 = vunpack.c.h.b16 %v459
    %v1017 = vunpack.c.l.b16 %v460
    %v1018 = vunpack.c.h.b16 %v460
    %v1019 = vunpack.c.l.b16 %v461
    %v1020 = vunpack.c.h.b16 %v461
    %v1021 = vunpack.c.l.b16 %v462
    %v1022 = vunpack.c.h.b16 %v462
    %v1023 = vunpack.c.l.b16 %v463
    %v1024 = vunpack.c.h.b16 %v463
    %v1025 = vunpack.c.l.b16 %v464
    %v1026 = vunpack.c.h.b16 %v464
    %v1027 = vunpack.c.l.b16 %v465
    %v1028 = vunpack.c.h.b16 %v465
    %v1029 = vunpack.c.l.b16 %v466
    %v1030 = vunpack.c.h.b16 %v466
    %v1031 = vunpack.c.l.b16 %v467
    %v1032 = vunpack.c.h.b16 %v467
    %v1033 = vunpack.c.l.b16 %v468
    %v1034 = vunpack.c.h.b16 %v468
    %v1035 = vunpack.c.l.b16 %v469
    %v1036 = vunpack.c.h.b16 %v469
    %v1037 = vunpack.c.l.b16 %v470
    %v1038 = vunpack.c.h.b16 %v470
    %v1039 = vunpack.c.l.b16 %v471
    %v1040 = vunpack.c.h.b16 %v471
    %v1041 = vunpack.c.l.b16 %v472
    %v1042 = vunpack.c.h.b16 %v472
    %v1043 = vunpack.c.l.b16 %v473
    %v1044 = vunpack.c.h.b16 %v473
    %v1045 = vunpack.c.l.b16 %v474
    %v1046 = vunpack.c.h.b16 %v474
    %v1047 = vunpack.c.l.b16 %v475
    %v1048 = vunpack.c.h.b16 %v475
    %v1049 = vunpack.c.l.b16 %v476
    %v1050 = vunpack.c.h.b16 %v476
    %v1051 = vunpack.c.l.b16 %v477
    %v1052 = vunpack.c.h.b16 %v477
    %v1053 = vunpack.c.l.b16 %v478
    %v1054 = vunpack.c.h.b16 %v478
    %v1055 = vunpack.c.l.b16 %v479
    %v1056 = vunpack.c.h.b16 %v479
    %v1057 = vunpack.c.l.b16 %v480
    %v1058 = vunpack.c.h.b16 %v480
    %v1059 = vunpack.c.l.b16 %v481
    %v1060 = vunpack.c.h.b16 %v481
    %v1061 = vunpack.c.l.b16 %v482
    %v1062 = vunpack.c.h.b16 %v482
    %v1063 = vunpack.c.l.b16 %v483
    %v1064 = vunpack.c.h.b16 %v483
    %v1065 = vunpack.c.l.b16 %v484
    %v1066 = vunpack.c.h.b16 %v484
    %v1067 = vunpack.c.l.b16 %v485
    %v1068 = vunpack.c.h.b16 %v485
    %v1069 = vunpack.c.l.b16 %v486
    %v1070 = vunpack.c.h.b16 %v486
    %v1071 = vunpack.c.l.b16 %v487
    %v1072 = vunpack.c.h.b16 %v487
    %v1073 = vunpack.c.l.b16 %v488
    %v1074 = vunpack.c.h.b16 %v488
    %v1075 = vunpack.c.l.b16 %v489
    %v1076 = vunpack.c.h.b16 %v489
    %v1077 = vunpack.c.l.b16 %v490
    %v1078 = vunpack.c.h.b16 %v490
    %v1079 = vunpack.c.l.b16 %v491
    %v1080 = vunpack.c.h.b16 %v491
    %v1081 = vunpack.c.l.b16 %v492
    %v1082 = vunpack.c.h.b16 %v492
    %v1083 = vunpack.c.l.b16 %v493
    %v1084 = vunpack.c.h.b16 %v493
    %v1085 = vunpack.c.l.b16 %v494
    %v1086 = vunpack.c.h.b16 %v494
    %v1087 = vunpack.c.l.b16 %v495
    %v1088 = vunpack.c.h.b16 %v495
    %v1089 = vunpack.c.l.b16 %v496
    %v1090 = vunpack.c.h.b16 %v496
    %v1091 = vunpack.c.l.b16 %v497
    %v1092 = vunpack.c.h.b16 %v497
    %v1093 = vunpack.c.l.b16 %v498
    %v1094 = vunpack.c.h.b16 %v498
    %v1095 = vunpack.c.l.b16 %v499
    %v1096 = vunpack.c.h.b16 %v499
    %v1097 = vunpack.c.l.b16 %v500
    %v1098 = vunpack.c.h.b16 %v500
    %v1099 = vpack.c.b16 %v719, %v715
    %v1100 = vpack.c.b16 %v720, %v716
    %v1101 = vpack.c.b16 %v721, %v717
    %v1102 = vpack.c.b16 %v722, %v718
    %v1103 = vpack.c.b16 %v727, %v723
    %v1104 = vpack.c.b16 %v728, %v724
    %v1105 = vpack.c.b16 %v729, %v725
    %v1106 = vpack.c.b16 %v730, %v726
    %v1107 = vpack.c.b16 %v735, %v731
    %v1108 = vpack.c.b16 %v736, %v732
    %v1109 = vpack.c.b16 %v737, %v733
    %v1110 = vpack.c.b16 %v738, %v734
    %v1111 = vpack.c.b16 %v743, %v739
    %v1112 = vpack.c.b16 %v744, %v740
    %v1113 = vpack.c.b16 %v745, %v741
    %v1114 = vpack.c.b16 %v746, %v742
    %v1115 = vpack.c.b16 %v751, %v747
    %v1116 = vpack.c.b16 %v752, %v748
    %v1117 = vpack.c.b16 %v753, %v749
    %v1118 = vpack.c.b16 %v754, %v750
    %v1119 = vpack.c.b16 %v759, %v755
    %v1120 = vpack.c.b16 %v760, %v756
    %v1121 = vpack.c.b16 %v761, %v757
    %v1122 = vpack.c.b16 %v762, %v758
    %v1123 = vpack.c.b16 %v767, %v763
    %v1124 = vpack.c.b16 %v768, %v764
    %v1125 = vpack.c.b16 %v769, %v765
    %v1126 = vpack.c.b16 %v770, %v766
    %v1127 = vpack.c.b16 %v775, %v771
    %v1128 = vpack.c.b16 %v776, %v772
    %v1129 = vpack.c.b16 %v777, %v773
    %v1130 = vpack.c.b16 %v778, %v774
    %v1131 = vpack.c.b16 %v783, %v779
    %v1132 = vpack.c.b16 %v784, %v780
    %v1133 = vpack.c.b16 %v785, %v781
    %v1134 = vpack.c.b16 %v786, %v782
    %v1135 = vpack.c.b16 %v791, %v787
    %v1136 = vpack.c.b16 %v792, %v788
    %v1137 = vpack.c.b16 %v793, %v789
    %v1138 = vpack.c.b16 %v794, %v790
    %v1139 = vpack.c.b16 %v799, %v795
    %v1140 = vpack.c.b16 %v800, %v796
    %v1141 = vpack.c.b16 %v801, %v797
    %v1142 = vpack.c.b16 %v802, %v798
    %v1143 = vpack.c.b16 %v807, %v803
    %v1144 = vpack.c.b16 %v808, %v804
    %v1145 = vpack.c.b16 %v809, %v805
    %v1146 = vpack.c.b16 %v810, %v806
    %v1147 = vpack.c.b16 %v815, %v811
    %v1148 = vpack.c.b16 %v816, %v812
    %v1149 = vpack.c.b16 %v817, %v813
    %v1150 = vpack.c.b16 %v818, %v814
    %v1151 = vpack.c.b16 %v823, %v819
    %v1152 = vpack.c.b16 %v824, %v820
    %v1153 = vpack.c.b16 %v825, %v821
    %v1154 = vpack.c.b16 %v826, %v822
    %v1155 = vpack.c.b16 %v831, %v827
    %v1156 = vpack.c.b16 %v832, %v828
    %v1157 = vpack.c.b16 %v833, %v829
    %v1158 = vpack.c.b16 %v834, %v830
    %v1159 = vpack.c.b16 %v839, %v835
    %v1160 = vpack.c.b16 %v840, %v836
    %v1161 = vpack.c.b16 %v841, %v837
    %v1162 = vpack.c.b16 %v842, %v838
    %v1163 = vpack.c.b16 %v847, %v843
    %v1164 = vpack.c.b16 %v848, %v844
    %v1165 = vpack.c.b16 %v849, %v845
    %v1166 = vpack.c.b16 %v850, %v846
    %v1167 = vpack.c.b16 %v855, %v851
    %v1168 = vpack.c.b16 %v856, %v852
    %v1169 = vpack.c.b16 %v857, %v853
    %v1170 = vpack.c.b16 %v858, %v854
    %v1171 = vpack.c.b16 %v863, %v859
    %v1172 = vpack.c.b16 %v864, %v860
    %v1173 = vpack.c.b16 %v865, %v861
    %v1174 = vpack.c.b16 %v866, %v862
    %v1175 = vpack.c.b16 %v871, %v867
    %v1176 = vpack.c.b16 %v872, %v868
    %v1177 = vpack.c.b16 %v873, %v869
    %v1178 = vpack.c.b16 %v874, %v870
    %v1179 = vpack.c.b16 %v879, %v875
    %v1180 = vpack.c.b16 %v880, %v876
    %v1181 = vpack.c.b16 %v881, %v877
    %v1182 = vpack.c.b16 %v882, %v878
    %v1183 = vpack.c.b16 %v887, %v883
    %v1184 = vpack.c.b16 %v888, %v884
    %v1185 = vpack.c.b16 %v889, %v885
    %v1186 = vpack.c.b16 %v890, %v886
    %v1187 = vpack.c.b16 %v895, %v891
    %v1188 = vpack.c.b16 %v896, %v892
    %v1189 = vpack.c.b16 %v897, %v893
    %v1190 = vpack.c.b16 %v898, %v894
    %v1191 = vpack.c.b16 %v903, %v899
    %v1192 = vpack.c.b16 %v904, %v900
    %v1193 = vpack.c.b16 %v905, %v901
    %v1194 = vpack.c.b16 %v906, %v902
    %v1195 = vpack.c.b16 %v911, %v907
    %v1196 = vpack.c.b16 %v912, %v908
    %v1197 = vpack.c.b16 %v913, %v909
    %v1198 = vpack.c.b16 %v914, %v910
    %v1199 = vpack.c.b16 %v919, %v915
    %v1200 = vpack.c.b16 %v920, %v916
    %v1201 = vpack.c.b16 %v921, %v917
    %v1202 = vpack.c.b16 %v922, %v918
    %v1203 = vpack.c.b16 %v927, %v923
    %v1204 = vpack.c.b16 %v928, %v924
    %v1205 = vpack.c.b16 %v929, %v925
    %v1206 = vpack.c.b16 %v930, %v926
    %v1207 = vpack.c.b16 %v935, %v931
    %v1208 = vpack.c.b16 %v936, %v932
    %v1209 = vpack.c.b16 %v937, %v933
    %v1210 = vpack.c.b16 %v938, %v934
    %v1211 = vpack.c.b16 %v943, %v939
    %v1212 = vpack.c.b16 %v944, %v940
    %v1213 = vpack.c.b16 %v945, %v941
    %v1214 = vpack.c.b16 %v946, %v942
    %v1215 = vpack.c.b16 %v951, %v947
    %v1216 = vpack.c.b16 %v952, %v948
    %v1217 = vpack.c.b16 %v953, %v949
    %v1218 = vpack.c.b16 %v954, %v950
    %v1219 = vpack.c.b16 %v959, %v955
    %v1220 = vpack.c.b16 %v960, %v956
    %v1221 = vpack.c.b16 %v961, %v957
    %v1222 = vpack.c.b16 %v962, %v958
    %v1223 = vpack.c.b16 %v967, %v963
    %v1224 = vpack.c.b16 %v968, %v964
    %v1225 = vpack.c.b16 %v969, %v965
    %v1226 = vpack.c.b16 %v970, %v966
    %v1227 = vpack.c.b16 %v975, %v971
    %v1228 = vpack.c.b16 %v976, %v972
    %v1229 = vpack.c.b16 %v977, %v973
    %v1230 = vpack.c.b16 %v978, %v974
    %v1231 = vpack.c.b16 %v983, %v979
    %v1232 = vpack.c.b16 %v984, %v980
    %v1233 = vpack.c.b16 %v985, %v981
    %v1234 = vpack.c.b16 %v986, %v982
    %v1235 = vpack.c.b16 %v991, %v987
    %v1236 = vpack.c.b16 %v992, %v988
    %v1237 = vpack.c.b16 %v993, %v989
    %v1238 = vpack.c.b16 %v994, %v990
    %v1239 = vpack.c.b16 %v999, %v995
    %v1240 = vpack.c.b16 %v1000, %v996
    %v1241 = vpack.c.b16 %v1001, %v997
    %v1242 = vpack.c.b16 %v1002, %v998
    %v1243 = vpack.c.b16 %v1007, %v1003
    %v1244 = vpack.c.b16 %v1008, %v1004
    %v1245 = vpack.c.b16 %v1009, %v1005
    %v1246 = vpack.c.b16 %v1010, %v1006
    %v1247 = vpack.c.b16 %v1015, %v1011
    %v1248 = vpack.c.b16 %v1016, %v1012
    %v1249 = vpack.c.b16 %v1017, %v1013
    %v1250 = vpack.c.b16 %v1018, %v1014
    %v1251 = vpack.c.b16 %v1023, %v1019
    %v1252 = vpack.c.b16 %v1024, %v1020
    %v1253 = vpack.c.b16 %v1025, %v1021
    %v1254 = vpack.c.b16 %v1026, %v1022
    %v1255 = vpack.c.b16 %v1031, %v1027
    %v1256 = vpack.c.b16 %v1032, %v1028
    %v1257 = vpack.c.b16 %v1033, %v1029
    %v1258 = vpack.c.b16 %v1034, %v1030
    %v1259 = vpack.c.b16 %v1039, %v1035
    %v1260 = vpack.c.b16 %v1040, %v1036
    %v1261 = vpack.c.b16 %v1041, %v1037
    %v1262 = vpack.c.b16 %v1042, %v1038
    %v1263 = vpack.c.b16 %v1047, %v1043
    %v1264 = vpack.c.b16 %v1048, %v1044
    %v1265 = vpack.c.b16 %v1049, %v1045
    %v1266 = vpack.c.b16 %v1050, %v1046
    %v1267 = vpack.c.b16 %v1055, %v1051
    %v1268 = vpack.c.b16 %v1056, %v1052
    %v1269 = vpack.c.b16 %v1057, %v1053
    %v1270 = vpack.c.b16 %v1058, %v1054
    %v1271 = vpack.c.b16 %v1063, %v1059
    %v1272 = vpack.c.b16 %v1064, %v1060
    %v1273 = vpack.c.b16 %v1065, %v1061
    %v1274 = vpack.c.b16 %v1066, %v1062
    %v1275 = vpack.c.b16 %v1071, %v1067
    %v1276 = vpack.c.b16 %v1072, %v1068
    %v1277 = vpack.c.b16 %v1073, %v1069
    %v1278 = vpack.c.b16 %v1074, %v1070
    %v1279 = vpack.c.b16 %v1079, %v1075
    %v1280 = vpack.c.b16 %v1080, %v1076
    %v1281 = vpack.c.b16 %v1081, %v1077
    %v1282 = vpack.c.b16 %v1082, %v1078
    %v1283 = vpack.c.b16 %v1087, %v1083
    %v1284 = vpack.c.b16 %v1088, %v1084
    %v1285 = vpack.c.b16 %v1089, %v1085
    %v1286 = vpack.c.b16 %v1090, %v1086
    %v1287 = vpack.c.b16 %v1095, %v1091
    %v1288 = vpack.c.b16 %v1096, %v1092
    %v1289 = vpack.c.b16 %v1097, %v1093
    %v1290 = vpack.c.b16 %v1098, %v1094
    %1483 = vmatprep.subr.bf16.mxu0 %v1100
    %1484 = vmatpush1.bf16.msra.mxu0 %v1099
    %1485 = vmatprep.subr.bf16.mxu0 %v1104
    %1486 = vmatpush1.bf16.msra.mxu0 %v1103
    %1487 = vmatprep.subr.bf16.mxu0 %v1108
    %1488 = vmatpush1.bf16.msra.mxu0 %v1107
    %1489 = vmatprep.subr.bf16.mxu0 %v1112
    %1490 = vmatpush1.bf16.msra.mxu0 %v1111
    %1491 = vmatprep.subr.bf16.mxu0 %v1116
    %1492 = vmatpush1.bf16.msra.mxu0 %v1115
    %1493 = vmatprep.subr.bf16.mxu0 %v1120
    %1494 = vmatpush1.bf16.msra.mxu0 %v1119
    %1495 = vmatprep.subr.bf16.mxu0 %v1124
    %1496 = vmatpush1.bf16.msra.mxu0 %v1123
    %1497 = vmatprep.subr.bf16.mxu0 %v1128
    %1498 = vmatpush1.bf16.msra.mxu0 %v1127
    %1499 = vmatprep.subr.bf16.mxu0 %v1132
    %1500 = vmatpush1.bf16.msra.mxu0 %v1131
    %1501 = vmatprep.subr.bf16.mxu0 %v1136
    %1502 = vmatpush1.bf16.msra.mxu0 %v1135
    %1503 = vmatprep.subr.bf16.mxu0 %v1140
    %1504 = vmatpush1.bf16.msra.mxu0 %v1139
    %1505 = vmatprep.subr.bf16.mxu0 %v1144
    %1506 = vmatpush1.bf16.msra.mxu0 %v1143
    %1507 = vmatprep.subr.bf16.mxu0 %v1148
    %1508 = vmatpush1.bf16.msra.mxu0 %v1147
    %1509 = vmatprep.subr.bf16.mxu0 %v1152
    %1510 = vmatpush1.bf16.msra.mxu0 %v1151
    %1511 = vmatprep.subr.bf16.mxu0 %v1156
    %1512 = vmatpush1.bf16.msra.mxu0 %v1155
    %1513 = vmatprep.subr.bf16.mxu0 %v1160
    %1514 = vmatpush1.bf16.msra.mxu0 %v1159
    %1515 = vmatprep.mubr.bf16.mxu0 %v304
    %1516 = vmatmul.mubr.bf16.gmra.mrb[0].mxu0 %v303
    %v1517 = vpop.f32.mrb[0].mxu0
    %v1518 = vadd.f32 %v506, %v1517
    %v1519 = vpop.f32.mrb[0].mxu0
    %v1520 = vadd.f32 %v510, %v1519
    %v1521 = vpop.f32.mrb[0].mxu0
    %v1522 = vadd.f32 %v506, %v1521
    %v1523 = vpop.f32.mrb[0].mxu0
    %v1524 = vadd.f32 %v510, %v1523
    %1525 = vdwg.mxu0
    %1526 = vmatprep.subr.bf16.mxu0 %v1164
    %1527 = vmatpush1.bf16.msra.mxu0 %v1163
    %1528 = vmatprep.subr.bf16.mxu0 %v1168
    %1529 = vmatpush1.bf16.msra.mxu0 %v1167
    %1530 = vmatprep.subr.bf16.mxu0 %v1172
    %1531 = vmatpush1.bf16.msra.mxu0 %v1171
    %1532 = vmatprep.subr.bf16.mxu0 %v1176
    %1533 = vmatpush1.bf16.msra.mxu0 %v1175
    %1534 = vmatprep.subr.bf16.mxu0 %v1180
    %1535 = vmatpush1.bf16.msra.mxu0 %v1179
    %1536 = vmatprep.subr.bf16.mxu0 %v1184
    %1537 = vmatpush1.bf16.msra.mxu0 %v1183
    %1538 = vmatprep.subr.bf16.mxu0 %v1188
    %1539 = vmatpush1.bf16.msra.mxu0 %v1187
    %1540 = vmatprep.subr.bf16.mxu0 %v1192
    %1541 = vmatpush1.bf16.msra.mxu0 %v1191
    %1542 = vmatprep.subr.bf16.mxu0 %v1196
    %1543 = vmatpush1.bf16.msra.mxu0 %v1195
    %1544 = vmatprep.subr.bf16.mxu0 %v1200
    %1545 = vmatpush1.bf16.msra.mxu0 %v1199
    %1546 = vmatprep.subr.bf16.mxu0 %v1204
    %1547 = vmatpush1.bf16.msra.mxu0 %v1203
    %1548 = vmatprep.subr.bf16.mxu0 %v1208
    %1549 = vmatpush1.bf16.msra.mxu0 %v1207
    %1550 = vmatprep.subr.bf16.mxu0 %v1212
    %1551 = vmatpush1.bf16.msra.mxu0 %v1211
    %1552 = vmatprep.subr.bf16.mxu0 %v1216
    %1553 = vmatpush1.bf16.msra.mxu0 %v1215
    %1554 = vmatprep.subr.bf16.mxu0 %v1220
    %1555 = vmatpush1.bf16.msra.mxu0 %v1219
    %1556 = vmatprep.subr.bf16.mxu0 %v1224
    %1557 = vmatpush1.bf16.msra.mxu0 %v1223
    %1558 = vmatprep.mubr.bf16.mxu0 %v306
    %1559 = vmatmul.mubr.bf16.gmra.mrb[0].mxu0 %v305
    %v1560 = vpop.f32.mrb[0].mxu0
    %v1561 = vadd.f32 %v1518, %v1560
    %v1562 = vpop.f32.mrb[0].mxu0
    %v1563 = vadd.f32 %v1520, %v1562
    %v1564 = vpop.f32.mrb[0].mxu0
    %v1565 = vadd.f32 %v1522, %v1564
    %v1566 = vpop.f32.mrb[0].mxu0
    %v1567 = vadd.f32 %v1524, %v1566
    %1568 = vdwg.mxu0
    %1569 = vmatprep.subr.bf16.mxu0 %v1228
    %1570 = vmatpush1.bf16.msra.mxu0 %v1227
    %1571 = vmatprep.subr.bf16.mxu0 %v1232
    %1572 = vmatpush1.bf16.msra.mxu0 %v1231
    %1573 = vmatprep.subr.bf16.mxu0 %v1236
    %1574 = vmatpush1.bf16.msra.mxu0 %v1235
    %1575 = vmatprep.subr.bf16.mxu0 %v1240
    %1576 = vmatpush1.bf16.msra.mxu0 %v1239
    %1577 = vmatprep.subr.bf16.mxu0 %v1244
    %1578 = vmatpush1.bf16.msra.mxu0 %v1243
    %1579 = vmatprep.subr.bf16.mxu0 %v1248
    %1580 = vmatpush1.bf16.msra.mxu0 %v1247
    %1581 = vmatprep.subr.bf16.mxu0 %v1252
    %1582 = vmatpush1.bf16.msra.mxu0 %v1251
    %1583 = vmatprep.subr.bf16.mxu0 %v1256
    %1584 = vmatpush1.bf16.msra.mxu0 %v1255
    %1585 = vmatprep.subr.bf16.mxu0 %v1260
    %1586 = vmatpush1.bf16.msra.mxu0 %v1259
    %1587 = vmatprep.subr.bf16.mxu0 %v1264
    %1588 = vmatpush1.bf16.msra.mxu0 %v1263
    %1589 = vmatprep.subr.bf16.mxu0 %v1268
    %1590 = vmatpush1.bf16.msra.mxu0 %v1267
    %1591 = vmatprep.subr.bf16.mxu0 %v1272
    %1592 = vmatpush1.bf16.msra.mxu0 %v1271
    %1593 = vmatprep.subr.bf16.mxu0 %v1276
    %1594 = vmatpush1.bf16.msra.mxu0 %v1275
    %1595 = vmatprep.subr.bf16.mxu0 %v1280
    %1596 = vmatpush1.bf16.msra.mxu0 %v1279
    %1597 = vmatprep.subr.bf16.mxu0 %v1284
    %1598 = vmatpush1.bf16.msra.mxu0 %v1283
    %1599 = vmatprep.subr.bf16.mxu0 %v1288
    %1600 = vmatpush1.bf16.msra.mxu0 %v1287
    %1601 = vmatprep.mubr.bf16.mxu0 %v308
    %1602 = vmatmul.mubr.bf16.gmra.mrb[0].mxu0 %v307
    %v1603 = vpop.f32.mrb[0].mxu0
    %v1604 = vadd.f32 %v1561, %v1603
    %v1605 = vpop.f32.mrb[0].mxu0
    %v1606 = vadd.f32 %v1563, %v1605
    %v1607 = vpop.f32.mrb[0].mxu0
    %v1608 = vadd.f32 %v1565, %v1607
    %v1609 = vpop.f32.mrb[0].mxu0
    %v1610 = vadd.f32 %v1567, %v1609
    %1611 = vdwg.mxu0
    %1612 = vmatprep.subr.bf16.mxu0 %v1102
    %1613 = vmatpush1.bf16.msra.mxu0 %v1101
    %1614 = vmatprep.subr.bf16.mxu0 %v1106
    %1615 = vmatpush1.bf16.msra.mxu0 %v1105
    %1616 = vmatprep.subr.bf16.mxu0 %v1110
    %1617 = vmatpush1.bf16.msra.mxu0 %v1109
    %1618 = vmatprep.subr.bf16.mxu0 %v1114
    %1619 = vmatpush1.bf16.msra.mxu0 %v1113
    %1620 = vmatprep.subr.bf16.mxu0 %v1118
    %1621 = vmatpush1.bf16.msra.mxu0 %v1117
    %1622 = vmatprep.subr.bf16.mxu0 %v1122
    %1623 = vmatpush1.bf16.msra.mxu0 %v1121
    %1624 = vmatprep.subr.bf16.mxu0 %v1126
    %1625 = vmatpush1.bf16.msra.mxu0 %v1125
    %1626 = vmatprep.subr.bf16.mxu0 %v1130
    %1627 = vmatpush1.bf16.msra.mxu0 %v1129
    %1628 = vmatprep.subr.bf16.mxu0 %v1134
    %1629 = vmatpush1.bf16.msra.mxu0 %v1133
    %1630 = vmatprep.subr.bf16.mxu0 %v1138
    %1631 = vmatpush1.bf16.msra.mxu0 %v1137
    %1632 = vmatprep.subr.bf16.mxu0 %v1142
    %1633 = vmatpush1.bf16.msra.mxu0 %v1141
    %1634 = vmatprep.subr.bf16.mxu0 %v1146
    %1635 = vmatpush1.bf16.msra.mxu0 %v1145
    %1636 = vmatprep.subr.bf16.mxu0 %v1150
    %1637 = vmatpush1.bf16.msra.mxu0 %v1149
    %1638 = vmatprep.subr.bf16.mxu0 %v1154
    %1639 = vmatpush1.bf16.msra.mxu0 %v1153
    %1640 = vmatprep.subr.bf16.mxu0 %v1158
    %1641 = vmatpush1.bf16.msra.mxu0 %v1157
    %1642 = vmatprep.subr.bf16.mxu0 %v1162
    %1643 = vmatpush1.bf16.msra.mxu0 %v1161
    %1644 = vmatprep.mubr.bf16.mxu0 %v304
    %1645 = vmatmul.mubr.bf16.gmra.mrb[0].mxu0 %v303
    %v1646 = vpop.f32.mrb[0].mxu0
    %v1647 = vadd.f32 %v514, %v1646
    %v1648 = vpop.f32.mrb[0].mxu0
    %v1649 = vadd.f32 %v518, %v1648
    %v1650 = vpop.f32.mrb[0].mxu0
    %v1651 = vadd.f32 %v514, %v1650
    %v1652 = vpop.f32.mrb[0].mxu0
    %v1653 = vadd.f32 %v518, %v1652
    %1654 = vdwg.mxu0
    %1655 = vmatprep.subr.bf16.mxu0 %v1166
    %1656 = vmatpush1.bf16.msra.mxu0 %v1165
    %1657 = vmatprep.subr.bf16.mxu0 %v1170
    %1658 = vmatpush1.bf16.msra.mxu0 %v1169
    %1659 = vmatprep.subr.bf16.mxu0 %v1174
    %1660 = vmatpush1.bf16.msra.mxu0 %v1173
    %1661 = vmatprep.subr.bf16.mxu0 %v1178
    %1662 = vmatpush1.bf16.msra.mxu0 %v1177
    %1663 = vmatprep.subr.bf16.mxu0 %v1182
    %1664 = vmatpush1.bf16.msra.mxu0 %v1181
    %1665 = vmatprep.subr.bf16.mxu0 %v1186
    %1666 = vmatpush1.bf16.msra.mxu0 %v1185
    %1667 = vmatprep.subr.bf16.mxu0 %v1190
    %1668 = vmatpush1.bf16.msra.mxu0 %v1189
    %1669 = vmatprep.subr.bf16.mxu0 %v1194
    %1670 = vmatpush1.bf16.msra.mxu0 %v1193
    %1671 = vmatprep.subr.bf16.mxu0 %v1198
    %1672 = vmatpush1.bf16.msra.mxu0 %v1197
    %1673 = vmatprep.subr.bf16.mxu0 %v1202
    %1674 = vmatpush1.bf16.msra.mxu0 %v1201
    %1675 = vmatprep.subr.bf16.mxu0 %v1206
    %1676 = vmatpush1.bf16.msra.mxu0 %v1205
    %1677 = vmatprep.subr.bf16.mxu0 %v1210
    %1678 = vmatpush1.bf16.msra.mxu0 %v1209
    %1679 = vmatprep.subr.bf16.mxu0 %v1214
    %1680 = vmatpush1.bf16.msra.mxu0 %v1213
    %1681 = vmatprep.subr.bf16.mxu0 %v1218
    %1682 = vmatpush1.bf16.msra.mxu0 %v1217
    %1683 = vmatprep.subr.bf16.mxu0 %v1222
    %1684 = vmatpush1.bf16.msra.mxu0 %v1221
    %1685 = vmatprep.subr.bf16.mxu0 %v1226
    %1686 = vmatpush1.bf16.msra.mxu0 %v1225
    %1687 = vmatprep.mubr.bf16.mxu0 %v306
    %1688 = vmatmul.mubr.bf16.gmra.mrb[0].mxu0 %v305
    %v1689 = vpop.f32.mrb[0].mxu0
    %v1690 = vadd.f32 %v1647, %v1689
    %v1691 = vpop.f32.mrb[0].mxu0
    %v1692 = vadd.f32 %v1649, %v1691
    %v1693 = vpop.f32.mrb[0].mxu0
    %v1694 = vadd.f32 %v1651, %v1693
    %v1695 = vpop.f32.mrb[0].mxu0
    %v1696 = vadd.f32 %v1653, %v1695
    %1697 = vdwg.mxu0
    %1698 = vmatprep.subr.bf16.mxu0 %v1230
    %1699 = vmatpush1.bf16.msra.mxu0 %v1229
    %1700 = vmatprep.subr.bf16.mxu0 %v1234
    %1701 = vmatpush1.bf16.msra.mxu0 %v1233
    %1702 = vmatprep.subr.bf16.mxu0 %v1238
    %1703 = vmatpush1.bf16.msra.mxu0 %v1237
    %1704 = vmatprep.subr.bf16.mxu0 %v1242
    %1705 = vmatpush1.bf16.msra.mxu0 %v1241
    %1706 = vmatprep.subr.bf16.mxu0 %v1246
    %1707 = vmatpush1.bf16.msra.mxu0 %v1245
    %1708 = vmatprep.subr.bf16.mxu0 %v1250
    %1709 = vmatpush1.bf16.msra.mxu0 %v1249
    %1710 = vmatprep.subr.bf16.mxu0 %v1254
    %1711 = vmatpush1.bf16.msra.mxu0 %v1253
    %1712 = vmatprep.subr.bf16.mxu0 %v1258
    %1713 = vmatpush1.bf16.msra.mxu0 %v1257
    %1714 = vmatprep.subr.bf16.mxu0 %v1262
    %1715 = vmatpush1.bf16.msra.mxu0 %v1261
    %1716 = vmatprep.subr.bf16.mxu0 %v1266
    %1717 = vmatpush1.bf16.msra.mxu0 %v1265
    %1718 = vmatprep.subr.bf16.mxu0 %v1270
    %1719 = vmatpush1.bf16.msra.mxu0 %v1269
    %1720 = vmatprep.subr.bf16.mxu0 %v1274
    %1721 = vmatpush1.bf16.msra.mxu0 %v1273
    %1722 = vmatprep.subr.bf16.mxu0 %v1278
    %1723 = vmatpush1.bf16.msra.mxu0 %v1277
    %1724 = vmatprep.subr.bf16.mxu0 %v1282
    %1725 = vmatpush1.bf16.msra.mxu0 %v1281
    %1726 = vmatprep.subr.bf16.mxu0 %v1286
    %1727 = vmatpush1.bf16.msra.mxu0 %v1285
    %1728 = vmatprep.subr.bf16.mxu0 %v1290
    %1729 = vmatpush1.bf16.msra.mxu0 %v1289
    %1730 = vmatprep.mubr.bf16.mxu0 %v308
    %1731 = vmatmul.mubr.bf16.gmra.mrb[0].mxu0 %v307
    %v1732 = vpop.f32.mrb[0].mxu0
    %v1733 = vadd.f32 %v1690, %v1732
    %v1734 = vpop.f32.mrb[0].mxu0
    %v1735 = vadd.f32 %v1692, %v1734
    %v1736 = vpop.f32.mrb[0].mxu0
    %v1737 = vadd.f32 %v1694, %v1736
    %v1738 = vpop.f32.mrb[0].mxu0
    %v1739 = vadd.f32 %v1696, %v1738
    %1740 = vdwg.mxu0
    %v1741 = vmax.f32 %v1604, 0.0
    %v1742 = vmax.f32 %v1606, 0.0
    %v1743 = vmax.f32 %v1733, 0.0
    %v1744 = vmax.f32 %v1735, 0.0
    %v1745 = vmax.f32 %v1608, 0.0
    %v1746 = vmax.f32 %v1610, 0.0
    %v1747 = vmax.f32 %v1737, 0.0
    %v1748 = vmax.f32 %v1739, 0.0
    %v1749 = vpack.c.bf16 %v1745, %v1741
    %v1750 = vpack.c.bf16 %v1746, %v1742
    %v1751 = vpack.c.bf16 %v1747, %v1743
    %v1752 = vpack.c.bf16 %v1748, %v1744
    %v1753 = vld [vmem:[#allocation8] sm:$0xf]
    %v1754 = vld [vmem:[#allocation8 + $0x4] sm:$0xf]
    %v1755 = vld [vmem:[#allocation8 + $0x8] sm:$0xf]
    %v1756 = vld [vmem:[#allocation8 + $0xc] sm:$0xf]
    %v1757 = vld [vmem:[#allocation8 + $0x10] sm:$0xf]
    %v1758 = vld [vmem:[#allocation8 + $0x14] sm:$0xf]
    %v1759 = vld [vmem:[#allocation8 + $0x18] sm:$0xf]
    %v1760 = vld [vmem:[#allocation8 + $0x1c] sm:$0xf]
    %v1761 = vld [vmem:[#allocation8 + $0x20] sm:$0xf]
    %v1762 = vld [vmem:[#allocation8 + $0x24] sm:$0xf]
    %v1763 = vld [vmem:[#allocation8 + $0x28] sm:$0xf]
    %v1764 = vld [vmem:[#allocation8 + $0x2c] sm:$0xf]
    %v1765 = vld [vmem:[#allocation8 + $0x30] sm:$0xf]
    %v1766 = vld [vmem:[#allocation8 + $0x34] sm:$0xf]
    %v1767 = vld [vmem:[#allocation8 + $0x38] sm:$0xf]
    %v1768 = vld [vmem:[#allocation8 + $0x3c] sm:$0xf]
    %v1769 = vld [vmem:[#allocation8 + $0x40] sm:$0xf]
    %v1770 = vld [vmem:[#allocation8 + $0x44] sm:$0xf]
    %v1771 = vld [vmem:[#allocation8 + $0x48] sm:$0xf]
    %v1772 = vld [vmem:[#allocation8 + $0x4c] sm:$0xf]
    %v1773 = vld [vmem:[#allocation8 + $0x50] sm:$0xf]
    %v1774 = vld [vmem:[#allocation8 + $0x54] sm:$0xf]
    %v1775 = vld [vmem:[#allocation8 + $0x58] sm:$0xf]
    %v1776 = vld [vmem:[#allocation8 + $0x5c] sm:$0xf]
    %v1777 = vld [vmem:[#allocation8 + $0x60] sm:$0xf]
    %v1778 = vld [vmem:[#allocation8 + $0x64] sm:$0xf]
    %v1779 = vld [vmem:[#allocation8 + $0x68] sm:$0xf]
    %v1780 = vld [vmem:[#allocation8 + $0x6c] sm:$0xf]
    %v1781 = vld [vmem:[#allocation8 + $0x70] sm:$0xf]
    %v1782 = vld [vmem:[#allocation8 + $0x74] sm:$0xf]
    %v1783 = vld [vmem:[#allocation8 + $0x78] sm:$0xf]
    %v1784 = vld [vmem:[#allocation8 + $0x7c] sm:$0xf]
    %v1785 = vld [vmem:[#allocation8 + $0x80] sm:$0xf]
    %v1786 = vld [vmem:[#allocation8 + $0x84] sm:$0xf]
    %v1787 = vld [vmem:[#allocation8 + $0x88] sm:$0xf]
    %v1788 = vld [vmem:[#allocation8 + $0x8c] sm:$0xf]
    %v1789 = vld [vmem:[#allocation8 + $0x90] sm:$0xf]
    %v1790 = vld [vmem:[#allocation8 + $0x94] sm:$0xf]
    %v1791 = vld [vmem:[#allocation8 + $0x98] sm:$0xf]
    %v1792 = vld [vmem:[#allocation8 + $0x9c] sm:$0xf]
    %v1793 = vld [vmem:[#allocation8 + $0xa0] sm:$0xf]
    %v1794 = vld [vmem:[#allocation8 + $0xa4] sm:$0xf]
    %v1795 = vld [vmem:[#allocation8 + $0xa8] sm:$0xf]
    %v1796 = vld [vmem:[#allocation8 + $0xac] sm:$0xf]
    %v1797 = vld [vmem:[#allocation8 + $0xb0] sm:$0xf]
    %v1798 = vld [vmem:[#allocation8 + $0xb4] sm:$0xf]
    %v1799 = vld [vmem:[#allocation8 + $0xb8] sm:$0xf]
    %v1800 = vld [vmem:[#allocation8 + $0xbc] sm:$0xf]
    %v1801 = vld [vmem:[#allocation8 + $0xc0] sm:$0xf]
    %v1802 = vld [vmem:[#allocation8 + $0xc4] sm:$0xf]
    %v1803 = vld [vmem:[#allocation8 + $0xc8] sm:$0xf]
    %v1804 = vld [vmem:[#allocation8 + $0xcc] sm:$0xf]
    %v1805 = vld [vmem:[#allocation8 + $0xd0] sm:$0xf]
    %v1806 = vld [vmem:[#allocation8 + $0xd4] sm:$0xf]
    %v1807 = vld [vmem:[#allocation8 + $0xd8] sm:$0xf]
    %v1808 = vld [vmem:[#allocation8 + $0xdc] sm:$0xf]
    %v1809 = vld [vmem:[#allocation8 + $0xe0] sm:$0xf]
    %v1810 = vld [vmem:[#allocation8 + $0xe4] sm:$0xf]
    %v1811 = vld [vmem:[#allocation8 + $0xe8] sm:$0xf]
    %v1812 = vld [vmem:[#allocation8 + $0xec] sm:$0xf]
    %v1813 = vld [vmem:[#allocation8 + $0xf0] sm:$0xf]
    %v1814 = vld [vmem:[#allocation8 + $0xf4] sm:$0xf]
    %v1815 = vld [vmem:[#allocation8 + $0xf8] sm:$0xf]
    %v1816 = vld [vmem:[#allocation8 + $0xfc] sm:$0xf]
    %v1817 = vld [vmem:[%s6] sm:$0x1]
    %v1819 = vlaneseq
    %v1820 = vshrl.u32 %v1819, 7
    %v1821 = vsub.s32 0, %v1820
    %v1822 = vrot.slane %v1817, %v1821
    %v1888 = vunpack.c.l.b16 %v1753
    %v1889 = vunpack.c.l.b16 %v1754
    %v1890 = vunpack.c.l.b16 %v1755
    %v1891 = vunpack.c.l.b16 %v1756
    %v1892 = vunpack.c.l.b16 %v1757
    %v1893 = vunpack.c.l.b16 %v1758
    %v1894 = vunpack.c.l.b16 %v1759
    %v1895 = vunpack.c.l.b16 %v1760
    %v1896 = vunpack.c.l.b16 %v1761
    %v1897 = vunpack.c.l.b16 %v1762
    %v1898 = vunpack.c.l.b16 %v1763
    %v1899 = vunpack.c.l.b16 %v1764
    %v1900 = vunpack.c.l.b16 %v1765
    %v1901 = vunpack.c.l.b16 %v1766
    %v1902 = vunpack.c.l.b16 %v1767
    %v1903 = vunpack.c.l.b16 %v1768
    %v1904 = vunpack.c.l.b16 %v1769
    %v1905 = vunpack.c.l.b16 %v1770
    %v1906 = vunpack.c.l.b16 %v1771
    %v1907 = vunpack.c.l.b16 %v1772
    %v1908 = vunpack.c.l.b16 %v1773
    %v1909 = vunpack.c.l.b16 %v1774
    %v1910 = vunpack.c.l.b16 %v1775
    %v1911 = vunpack.c.l.b16 %v1776
    %v1912 = vunpack.c.l.b16 %v1777
    %v1913 = vunpack.c.l.b16 %v1778
    %v1914 = vunpack.c.l.b16 %v1779
    %v1915 = vunpack.c.l.b16 %v1780
    %v1916 = vunpack.c.l.b16 %v1781
    %v1917 = vunpack.c.l.b16 %v1782
    %v1918 = vunpack.c.l.b16 %v1783
    %v1919 = vunpack.c.l.b16 %v1784
    %v1920 = vunpack.c.l.b16 %v1785
    %v1921 = vunpack.c.l.b16 %v1786
    %v1922 = vunpack.c.l.b16 %v1787
    %v1923 = vunpack.c.l.b16 %v1788
    %v1924 = vunpack.c.l.b16 %v1789
    %v1925 = vunpack.c.l.b16 %v1790
    %v1926 = vunpack.c.l.b16 %v1791
    %v1927 = vunpack.c.l.b16 %v1792
    %v1928 = vunpack.c.l.b16 %v1793
    %v1929 = vunpack.c.l.b16 %v1794
    %v1930 = vunpack.c.l.b16 %v1795
    %v1931 = vunpack.c.l.b16 %v1796
    %v1932 = vunpack.c.l.b16 %v1797
    %v1933 = vunpack.c.l.b16 %v1798
    %v1934 = vunpack.c.l.b16 %v1799
    %v1935 = vunpack.c.l.b16 %v1800
    %v1936 = vunpack.c.l.b16 %v1801
    %v1937 = vunpack.c.l.b16 %v1802
    %v1938 = vunpack.c.l.b16 %v1803
    %v1939 = vunpack.c.l.b16 %v1804
    %v1940 = vunpack.c.l.b16 %v1805
    %v1941 = vunpack.c.l.b16 %v1806
    %v1942 = vunpack.c.l.b16 %v1807
    %v1943 = vunpack.c.l.b16 %v1808
    %v1944 = vunpack.c.l.b16 %v1809
    %v1945 = vunpack.c.l.b16 %v1810
    %v1946 = vunpack.c.l.b16 %v1811
    %v1947 = vunpack.c.l.b16 %v1812
    %v1948 = vunpack.c.l.b16 %v1813
    %v1949 = vunpack.c.l.b16 %v1814
    %v1950 = vunpack.c.l.b16 %v1815
    %v1951 = vunpack.c.l.b16 %v1816
    %v1952 = vpack.c.b16 %v1889, %v1888
    %v1953 = vpack.c.b16 %v1891, %v1890
    %v1954 = vpack.c.b16 %v1893, %v1892
    %v1955 = vpack.c.b16 %v1895, %v1894
    %v1956 = vpack.c.b16 %v1897, %v1896
    %v1957 = vpack.c.b16 %v1899, %v1898
    %v1958 = vpack.c.b16 %v1901, %v1900
    %v1959 = vpack.c.b16 %v1903, %v1902
    %v1960 = vpack.c.b16 %v1905, %v1904
    %v1961 = vpack.c.b16 %v1907, %v1906
    %v1962 = vpack.c.b16 %v1909, %v1908
    %v1963 = vpack.c.b16 %v1911, %v1910
    %v1964 = vpack.c.b16 %v1913, %v1912
    %v1965 = vpack.c.b16 %v1915, %v1914
    %v1966 = vpack.c.b16 %v1917, %v1916
    %v1967 = vpack.c.b16 %v1919, %v1918
    %v1968 = vpack.c.b16 %v1921, %v1920
    %v1969 = vpack.c.b16 %v1923, %v1922
    %v1970 = vpack.c.b16 %v1925, %v1924
    %v1971 = vpack.c.b16 %v1927, %v1926
    %v1972 = vpack.c.b16 %v1929, %v1928
    %v1973 = vpack.c.b16 %v1931, %v1930
    %v1974 = vpack.c.b16 %v1933, %v1932
    %v1975 = vpack.c.b16 %v1935, %v1934
    %v1976 = vpack.c.b16 %v1937, %v1936
    %v1977 = vpack.c.b16 %v1939, %v1938
    %v1978 = vpack.c.b16 %v1941, %v1940
    %v1979 = vpack.c.b16 %v1943, %v1942
    %v1980 = vpack.c.b16 %v1945, %v1944
    %v1981 = vpack.c.b16 %v1947, %v1946
    %v1982 = vpack.c.b16 %v1949, %v1948
    %v1983 = vpack.c.b16 %v1951, %v1950
    %2016 = vmatprep.subr.bf16.mxu0 0
    %2017 = vmatpush1.bf16.msra.mxu0 %v1952
    %2018 = vmatprep.subr.bf16.mxu0 0
    %2019 = vmatpush1.bf16.msra.mxu0 %v1953
    %2020 = vmatprep.subr.bf16.mxu0 0
    %2021 = vmatpush1.bf16.msra.mxu0 %v1954
    %2022 = vmatprep.subr.bf16.mxu0 0
    %2023 = vmatpush1.bf16.msra.mxu0 %v1955
    %2024 = vmatprep.subr.bf16.mxu0 0
    %2025 = vmatpush1.bf16.msra.mxu0 %v1956
    %2026 = vmatprep.subr.bf16.mxu0 0
    %2027 = vmatpush1.bf16.msra.mxu0 %v1957
    %2028 = vmatprep.subr.bf16.mxu0 0
    %2029 = vmatpush1.bf16.msra.mxu0 %v1958
    %2030 = vmatprep.subr.bf16.mxu0 0
    %2031 = vmatpush1.bf16.msra.mxu0 %v1959
    %2032 = vmatprep.subr.bf16.mxu0 0
    %2033 = vmatpush1.bf16.msra.mxu0 %v1960
    %2034 = vmatprep.subr.bf16.mxu0 0
    %2035 = vmatpush1.bf16.msra.mxu0 %v1961
    %2036 = vmatprep.subr.bf16.mxu0 0
    %2037 = vmatpush1.bf16.msra.mxu0 %v1962
    %2038 = vmatprep.subr.bf16.mxu0 0
    %2039 = vmatpush1.bf16.msra.mxu0 %v1963
    %2040 = vmatprep.subr.bf16.mxu0 0
    %2041 = vmatpush1.bf16.msra.mxu0 %v1964
    %2042 = vmatprep.subr.bf16.mxu0 0
    %2043 = vmatpush1.bf16.msra.mxu0 %v1965
    %2044 = vmatprep.subr.bf16.mxu0 0
    %2045 = vmatpush1.bf16.msra.mxu0 %v1966
    %2046 = vmatprep.subr.bf16.mxu0 0
    %2047 = vmatpush1.bf16.msra.mxu0 %v1967
    %2048 = vmatprep.mubr.bf16.mxu0 %v1750
    %2049 = vmatmul.mubr.bf16.gmra.mrb[0].mxu0 %v1749
    %v2050 = vpop.f32.mrb[0].mxu0
    %v2051 = vadd.f32 %v1822, %v2050
    %v2052 = vpop.f32.mrb[0].mxu0
    %v2053 = vpop.f32.mrb[0].mxu0
    %v2054 = vadd.f32 %v1822, %v2053
    %v2055 = vpop.f32.mrb[0].mxu0
    %2056 = vdwg.mxu0
    %2057 = vmatprep.subr.bf16.mxu0 0
    %2058 = vmatpush1.bf16.msra.mxu0 %v1968
    %2059 = vmatprep.subr.bf16.mxu0 0
    %2060 = vmatpush1.bf16.msra.mxu0 %v1969
    %2061 = vmatprep.subr.bf16.mxu0 0
    %2062 = vmatpush1.bf16.msra.mxu0 %v1970
    %2063 = vmatprep.subr.bf16.mxu0 0
    %2064 = vmatpush1.bf16.msra.mxu0 %v1971
    %2065 = vmatprep.subr.bf16.mxu0 0
    %2066 = vmatpush1.bf16.msra.mxu0 %v1972
    %2067 = vmatprep.subr.bf16.mxu0 0
    %2068 = vmatpush1.bf16.msra.mxu0 %v1973
    %2069 = vmatprep.subr.bf16.mxu0 0
    %2070 = vmatpush1.bf16.msra.mxu0 %v1974
    %2071 = vmatprep.subr.bf16.mxu0 0
    %2072 = vmatpush1.bf16.msra.mxu0 %v1975
    %2073 = vmatprep.subr.bf16.mxu0 0
    %2074 = vmatpush1.bf16.msra.mxu0 %v1976
    %2075 = vmatprep.subr.bf16.mxu0 0
    %2076 = vmatpush1.bf16.msra.mxu0 %v1977
    %2077 = vmatprep.subr.bf16.mxu0 0
    %2078 = vmatpush1.bf16.msra.mxu0 %v1978
    %2079 = vmatprep.subr.bf16.mxu0 0
    %2080 = vmatpush1.bf16.msra.mxu0 %v1979
    %2081 = vmatprep.subr.bf16.mxu0 0
    %2082 = vmatpush1.bf16.msra.mxu0 %v1980
    %2083 = vmatprep.subr.bf16.mxu0 0
    %2084 = vmatpush1.bf16.msra.mxu0 %v1981
    %2085 = vmatprep.subr.bf16.mxu0 0
    %2086 = vmatpush1.bf16.msra.mxu0 %v1982
    %2087 = vmatprep.subr.bf16.mxu0 0
    %2088 = vmatpush1.bf16.msra.mxu0 %v1983
    %2089 = vmatprep.mubr.bf16.mxu0 %v1752
    %2090 = vmatmul.mubr.bf16.gmra.mrb[0].mxu0 %v1751
    %v2091 = vpop.f32.mrb[0].mxu0
    %v2092 = vadd.f32 %v2051, %v2091
    %v2093 = vpop.f32.mrb[0].mxu0
    %v2094 = vpop.f32.mrb[0].mxu0
    %v2095 = vadd.f32 %v2054, %v2094
    %v2096 = vpop.f32.mrb[0].mxu0
    %2097 = vdwg.mxu0
    %v2098 = vtanh.pop %v2092
    %v2099 = vtanh.pop %v2095
    %v2100 = vmul.f32 %v2098, 6.0
    %v2101 = vmul.f32 %v2099, 6.0
    %2102 = vst [vmem:[#allocation10] sm:$0xff] %v2100
    %2103 = vst [vmem:[#allocation10 + $0x8] sm:$0xff] %v2101
    // Predicated region
    $region46: #{tpu_custom_call.1} parent=1 // pred_check
      _
    $region47: #{tpu_custom_call.1} parent=1 // pred_check_branch
      %2105 = sbr.rel (0) target = $region49
    $region48: #{tpu_custom_call.1} parent=1 // pred_region
      %s2107 = ssub.s32 256, 256
      %2108 = vsyncadd [#allocation4], %s2107
      %s2109 = sshll.u32 [#allocation10], 4
      %s2110 = int_to_ptr.vmem [resolvable:$true] %s2109
      %2115 = dma.vmem_to_hbm [thread:$0]  %s2110, 256, %s7, [#allocation4], 128, 128, 8
    $region49: #{tpu_custom_call.1} parent=1 // pred_fallthru
      _
    // Predicated region
    $region50: #{tpu_custom_call.1} parent=1 // pred_check
      _
    $region51: #{tpu_custom_call.1} parent=1 // pred_check_branch
      %2117 = sbr.rel (0) target = $region53
    $region52: #{tpu_custom_call.1} parent=1 // pred_region
      %2118 = dma.done [#allocation4], 256
    $region53: #{tpu_custom_call.1} parent=1 // pred_fallthru
      _
    %2119 = vsyncpa [#allocation3], 1
    %2120 = vsyncpa [#allocation6], 1
    %2121 = vsyncpa [#allocation9], 1
    %2122 = vsyncpa [#allocation4], 1

</llo_original>
